<compile_context>
chip_gen: v6e
topology: v6e:2x2x1
jax: 0.10.0
libtpu: 0.0.40
codegen_flags: <defaults>
</compile_context>

<pallas_src>
import functools

import jax
import jax.numpy as jnp
from jax import lax
from jax.experimental import pallas as pl
from jax.experimental.pallas import tpu as pltpu

LANE = 128


def _round_up(x, m):
    return ((x + m - 1) // m) * m


def _cdiv(a, b):
    return -(-a // b)


def _tpu_generation():
    """Best-effort TPU generation (4/5/6/7); None if unknown."""
    try:
        kind = jax.devices()[0].device_kind.lower()
    except Exception:
        return None
    for g in (7, 6, 5, 4):
        if "v%d" % g in kind:
            return g
    return None


def _choose_tiling(n, gen, max_tile=1024):
    """Batch tile (multiple of 16) and grid step count.

    v7x (2 TCs/chip): force an EVEN number of grid steps so the 'parallel'
    batch axis shards evenly across cores.  v5e/v6e (1 TC): one maximal tile,
    extra grid steps are pure per-step overhead.
    """
    n16 = _round_up(max(n, 1), 16)
    if gen == 7 and n16 >= 32:
        steps = max(2, 2 * _cdiv(n16, 2 * max_tile))
    else:
        steps = max(1, _cdiv(n16, max_tile))
    tile = _round_up(_cdiv(n16, steps), 16)
    return tile, steps, steps * tile


# ----------------------------- Pallas kernel ---------------------------------

def _physics_kernel(x_ref, w_enc_ref, b_enc_ref, w_proc_ref, b_proc_ref,
                    w_dec_ref, b_dec_ref, out_ref, *,
                    n_layer, num_chains, compute_dtype):
    cd = compute_dtype

    def dense_relu(a, w, b):
        return jnp.maximum(
            jnp.dot(a.astype(cd), w, preferred_element_type=jnp.float32) + b,
            0.0)

    def decode(a):
        return (jnp.dot(a.astype(cd), w_dec_ref[...],
                        preferred_element_type=jnp.float32)
                + b_dec_ref[...]).astype(out_ref.dtype)

    x = x_ref[...]
    w_enc = w_enc_ref[...]
    b_enc = b_enc_ref[...]

    if num_chains == 1:
        # Encoder: single dense MXU pass (host already fused & padded K).
        h = dense_relu(x, w_enc, b_enc)
        if n_layer <= 8:
            for l in range(n_layer):                 # static unroll: LLO visibility
                h = dense_relu(h, w_proc_ref[l], b_proc_ref[l])
        elif n_layer > 0:
            h = lax.fori_loop(
                0, n_layer,
                lambda l, hc: dense_relu(hc, w_proc_ref[l], b_proc_ref[l]),
                h, unroll=2)
        out_ref[...] = decode(h)
    else:
        # Two independent M sub-chains, interleaved: keeps the MXU result FIFO
        # (v5e/v6e MRF) busy instead of stalling on the serial layer chain.
        half = x.shape[0] // 2
        h0 = dense_relu(x[:half], w_enc, b_enc)
        h1 = dense_relu(x[half:], w_enc, b_enc)
        if n_layer <= 8:
            for l in range(n_layer):
                w, b = w_proc_ref[l], b_proc_ref[l]
                h0 = dense_relu(h0, w, b)
                h1 = dense_relu(h1, w, b)
        elif n_layer > 0:
            def body(l, carry):
                a0, a1 = carry
                w, b = w_proc_ref[l], b_proc_ref[l]
                return dense_relu(a0, w, b), dense_relu(a1, w, b)
            h0, h1 = lax.fori_loop(0, n_layer, body, (h0, h1), unroll=2)
        out_ref[:half] = decode(h0)
        out_ref[half:] = decode(h1)


# --------------------------- param packing (host, once) -----------------------

def pack_params(params, *, compute_dtype=jnp.bfloat16):
    """Pad hidden / decoder lanes to 128, K to 16, fuse the decoder heads and
    cast weights to the MXU compute dtype (biases stay f32).  Done once."""
    w_enc, b_enc = params["w_enc"], params["b_enc"]      # (D_in, H), (1, H)
    w_proc, b_proc = params["w_proc"], params["b_proc"]  # (L, H, H), (L, 1, H)
    w_sur, b_sur = params["w_sur"], params["b_sur"]      # (H, S_out), (1, S_out)
    w_col, b_col = params["w_col"], params["b_col"]      # (H, C_flat), (1, C_flat)

    d_in, H = w_enc.shape
    Hp = _round_up(H, LANE)
    Kp = _round_up(d_in, 16)                 # bf16 sublane multiple for fused K
    s_out, c_flat = w_sur.shape[1], w_col.shape[1]
    dec = s_out + c_flat
    dec_p = _round_up(dec, LANE)

    def padw(w, rows, cols):
        return jnp.pad(w, ((0, rows - w.shape[0]), (0, cols - w.shape[1])))

    packed = {
        # One fused encoder weight: the concat happens host-side, so the
        # encoder is a single dense matmul instead of three tiny-K dots.
        "w_enc": padw(w_enc, Kp, Hp).astype(compute_dtype),
        "b_enc": jnp.pad(b_enc, ((0, 0), (0, Hp - H))).astype(jnp.float32),
        "w_proc": jnp.pad(w_proc, ((0, 0), (0, Hp - H), (0, Hp - H))
                          ).astype(compute_dtype),
        "b_proc": jnp.pad(b_proc, ((0, 0), (0, 0), (0, Hp - H))
                          ).astype(jnp.float32),
        # Fused decoder heads -> one lane-dense output slab.
        # NOTE: w_col columns are level-major (matches the reference reshape).
        "w_dec": padw(jnp.concatenate([w_sur, w_col], axis=-1), Hp, dec_p
                      ).astype(compute_dtype),
        "b_dec": jnp.pad(jnp.concatenate([b_sur, b_col], axis=-1),
                         ((0, 0), (0, dec_p - dec))).astype(jnp.float32),
    }
    packed["meta"] = dict(d_in=d_in, k_pad=Kp, hidden_pad=Hp, s_out=s_out,
                          c_flat=c_flat, dec_pad=dec_p,
                          n_layer=int(w_proc.shape[0]))
    return packed


# ------------------------------ forward wrapper --------------------------------

_WEIGHT_KEYS = ("w_enc", "b_enc", "w_proc", "b_proc", "w_dec", "b_dec")


def physics_forward(surface, col_var, forced, packed, *, max_batch_tile=1024):
    meta = packed["meta"]
    n_layer, Hp, dec_p = meta["n_layer"], meta["hidden_pad"], meta["dec_pad"]
    s_out, c_flat = meta["s_out"], meta["c_flat"]
    d_in, Kp = meta["d_in"], meta["k_pad"]

    N = surface.shape[0]
    n_levels = col_var.shape[1]
    gen = _tpu_generation()

    compute_dtype = packed["w_enc"].dtype
    # bf16 path also emits the output slab in bf16 (halves HBM writeback);
    # f32 path stays f32 so the numerics-neutrality check is exact.
    out_dtype = jnp.bfloat16 if compute_dtype == jnp.bfloat16 else jnp.float32
    out_itemsize = jnp.dtype(out_dtype).itemsize

    # Host-side fusion of the encoder input (cheap N x ~D_in copy).
    x = jnp.concatenate([surface, forced, col_var.reshape(N, -1)], axis=-1)
    assert x.shape[1] == d_in

    tile, steps, n_pad = _choose_tiling(N, gen, max_batch_tile)
    x = jnp.pad(x, ((0, n_pad - N), (0, Kp - d_in)))        # zero rows / K lanes

    # Interleave two M sub-chains on v5e/v6e (MRF) for deep, narrow stacks.
    num_chains = 2 if (gen in (5, 6) and Hp <= 256 and n_layer >= 2
                       and tile >= 32) else 1

    weight_bytes = sum(int(packed[k].nbytes) for k in _WEIGHT_KEYS)
    flops = 2 * n_pad * (Kp * Hp + n_layer * Hp * Hp + Hp * dec_p)
    bytes_accessed = (n_pad * Kp * 4 + n_pad * dec_p * out_itemsize
                      + weight_bytes)

    def vmem_limit(single_buffer_weights):
        io = 2 * tile * (Kp * 4 + dec_p * out_itemsize)       # double-buffered I/O
        act = 4 * tile * Hp * 4                                # activation headroom
        need = weight_bytes * (1 if single_buffer_weights else 2) + io + act
        cap = (56 if gen == 7 else 100) * (1 << 20)            # 64 MiB/TC on v7x
        return int(min(cap, max(32 << 20, int(1.25 * need))))

    def build(single_buffer_weights):
        def inv(shape):
            idx = lambda i, _n=len(shape): (0,) * _n
            if single_buffer_weights:
                # Grid-invariant weights never re-fetch; single-buffer them to
                # halve their VMEM footprint (headroom for tile size / v7x).
                return pl.BlockSpec(shape, idx, pipeline_mode=pl.Buffered(1))
            return pl.BlockSpec(shape, idx)

        return pl.pallas_call(
            functools.partial(_physics_kernel, n_layer=n_layer,
                              num_chains=num_chains,
                              compute_dtype=compute_dtype),
            out_shape=jax.ShapeDtypeStruct((n_pad, dec_p), out_dtype),
            grid_spec=pltpu.PrefetchScalarGridSpec(
                num_scalar_prefetch=0,
                grid=(steps,),
                in_specs=[
                    pl.BlockSpec((tile, Kp), lambda i: (i, 0)),   # fused x
                    inv(packed["w_enc"].shape),
                    inv(packed["b_enc"].shape),
                    inv(packed["w_proc"].shape),
                    inv(packed["b_proc"].shape),
                    inv(packed["w_dec"].shape),
                    inv(packed["b_dec"].shape),
                ],
                out_specs=pl.BlockSpec((tile, dec_p), lambda i: (i, 0)),
            ),
            compiler_params=pltpu.CompilerParams(
                dimension_semantics=("parallel",),
                vmem_limit_bytes=vmem_limit(single_buffer_weights)),
            cost_estimate=pl.CostEstimate(flops=int(flops), transcendentals=0,
                                          bytes_accessed=int(bytes_accessed)),
        )

    args = (x, packed["w_enc"], packed["b_enc"], packed["w_proc"],
            packed["b_proc"], packed["w_dec"], packed["b_dec"])
    try:
        out = build(True)(*args)
    except Exception:
        # Fallback if this JAX build rejects single-buffered pipeline_mode.
        out = build(False)(*args)

    sur = out[:N, :s_out]
    col = out[:N, s_out:s_out + c_flat].reshape(N, n_levels, c_flat // n_levels)
    return sur, col


# --------------------------- param init / reference ---------------------------

def init_params(key, d_in, hidden, n_layer, s_out, c_out_flat):
    ks = jax.random.split(key, 8)

    def lin(k, fan_in, fan_out):
        return jax.random.normal(k, (fan_in, fan_out), jnp.float32) / jnp.sqrt(fan_in)

    return {
        "w_enc": lin(ks[0], d_in, hidden),
        "b_enc": jax.random.normal(ks[1], (1, hidden), jnp.float32) * 0.01,
        "w_proc": jnp.stack([lin(k, hidden, hidden)
                             for k in jax.random.split(ks[2], n_layer)]),
        "b_proc": jax.random.normal(ks[3], (n_layer, 1, hidden), jnp.float32) * 0.01,
        "w_sur": lin(ks[4], hidden, s_out),
        "b_sur": jax.random.normal(ks[5], (1, s_out), jnp.float32) * 0.01,
        "w_col": lin(ks[6], hidden, c_out_flat),
        "b_col": jax.random.normal(ks[7], (1, c_out_flat), jnp.float32) * 0.01,
    }


def physics_reference(surface, col_var, forced, params):
    N = surface.shape[0]
    x = jnp.concatenate([surface, forced, col_var.reshape(N, -1)], axis=-1)
    h = jnp.maximum(x @ params["w_enc"] + params["b_enc"], 0.0)
    for l in range(params["w_proc"].shape[0]):
        h = jnp.maximum(h @ params["w_proc"][l] + params["b_proc"][l], 0.0)
    sur = h @ params["w_sur"] + params["b_sur"]
    col = h @ params["w_col"] + params["b_col"]
    return sur, col.reshape(N, col_var.shape[1], -1)


# ------------------------------------ main ------------------------------------

if __name__ == "__main__":
    # Small synthetic configuration (matches the module's constructor args).
    N = 16                        # grid points (batch)
    surface_vars = 4
    forced_vars = 2
    column_vars_input = 3
    n_levels = 8
    hidden_dims = 32
    n_layer = 2
    surface_vars_output = 3
    column_vars_output = 2

    d_in = (surface_vars + forced_vars) + n_levels * column_vars_input
    c_out_flat = n_levels * column_vars_output

    key = jax.random.PRNGKey(0)
    k_sur, k_col, k_for, k_par = jax.random.split(key, 4)
    surface = jax.random.normal(k_sur, (N, surface_vars), jnp.float32)
    col_var = jax.random.normal(k_col, (N, n_levels, column_vars_input), jnp.float32)
    forced = jax.random.normal(k_for, (N, forced_vars), jnp.float32)

    params = init_params(k_par, d_in, hidden_dims, n_layer,
                         surface_vars_output, c_out_flat)
    sur_ref, col_ref = physics_reference(surface, col_var, forced, params)

    # f32 compute path: zero-padding / head-fusion must be numerics-neutral.
    packed_f32 = pack_params(params, compute_dtype=jnp.float32)
    sur32, col32 = physics_forward(surface, col_var, forced, packed_f32)
    jax.block_until_ready((sur32, col32))
    assert sur32.shape == (N, surface_vars_output)
    assert col32.shape == (N, n_levels, column_vars_output)
    assert jnp.allclose(sur32, sur_ref, atol=1e-4, rtol=1e-4)
    assert jnp.allclose(col32, col_ref, atol=1e-4, rtol=1e-4)

    # bf16 MXU path (default perf mode on v5e/v6e/v7x), f32 accumulation.
    packed_bf16 = pack_params(params, compute_dtype=jnp.bfloat16)
    sur_bf, col_bf = physics_forward(surface, col_var, forced, packed_bf16)
    jax.block_until_ready((sur_bf, col_bf))
    assert sur_bf.shape == (N, surface_vars_output)
    assert col_bf.shape == (N, n_levels, column_vars_output)
    assert jnp.allclose(sur_bf.astype(jnp.float32), sur_ref, atol=5e-2, rtol=5e-2)
    assert jnp.allclose(col_bf.astype(jnp.float32), col_ref, atol=5e-2, rtol=5e-2)

    print("KERNEL_OK")
</pallas_src>

<mosaic_0001>
module attributes {stable_mosaic.version = 11 : i64} {
  func.func @_physics_kernel(%arg0: i32, %arg1: memref<16x32xf32, #tpu.memory_space<vmem>>, %arg2: memref<32x128xf32, #tpu.memory_space<vmem>>, %arg3: memref<1x128xf32, #tpu.memory_space<vmem>>, %arg4: memref<2x128x128xf32, #tpu.memory_space<vmem>>, %arg5: memref<2x1x128xf32, #tpu.memory_space<vmem>>, %arg6: memref<128x128xf32, #tpu.memory_space<vmem>>, %arg7: memref<1x128xf32, #tpu.memory_space<vmem>>, %arg8: memref<16x128xf32, #tpu.memory_space<vmem>>) attributes {dimension_semantics = [#tpu.dimension_semantics<parallel>], iteration_bounds = array<i64: 1>, scalar_prefetch = 0 : i64, scratch_operands = 0 : i64, tpu.core_type = #tpu.core_type<tc>, window_params = [{transform_indices = @transform_0, window_bounds = array<i64: 16, 32>}, {pipeline_mode = #tpu.pipeline_mode<synchronous>, transform_indices = @transform_1, window_bounds = array<i64: 32, 128>}, {pipeline_mode = #tpu.pipeline_mode<synchronous>, transform_indices = @transform_2, window_bounds = array<i64: 1, 128>}, {pipeline_mode = #tpu.pipeline_mode<synchronous>, transform_indices = @transform_3, window_bounds = array<i64: 2, 128, 128>}, {pipeline_mode = #tpu.pipeline_mode<synchronous>, transform_indices = @transform_4, window_bounds = array<i64: 2, 1, 128>}, {pipeline_mode = #tpu.pipeline_mode<synchronous>, transform_indices = @transform_5, window_bounds = array<i64: 128, 128>}, {pipeline_mode = #tpu.pipeline_mode<synchronous>, transform_indices = @transform_6, window_bounds = array<i64: 1, 128>}, {transform_indices = @transform_7, window_bounds = array<i64: 16, 128>}]} {
    %c0 = arith.constant 0 : index
    %c0_0 = arith.constant 0 : index
    %0 = vector.load %arg1[%c0, %c0_0] : memref<16x32xf32, #tpu.memory_space<vmem>>, vector<16x32xf32>
    %c0_1 = arith.constant 0 : index
    %c0_2 = arith.constant 0 : index
    %1 = vector.load %arg2[%c0_1, %c0_2] : memref<32x128xf32, #tpu.memory_space<vmem>>, vector<32x128xf32>
    %c0_3 = arith.constant 0 : index
    %c0_4 = arith.constant 0 : index
    %2 = vector.load %arg3[%c0_3, %c0_4] : memref<1x128xf32, #tpu.memory_space<vmem>>, vector<1x128xf32>
    %cst = arith.constant dense<0.000000e+00> : vector<16x128xf32>
    %3 = tpu.matmul %0, %1, %cst {dimension_numbers = #tpu.dot_dimension_numbers<[1], [0], [0], [1], [0, 0, 1, 1], [], []>} : vector<16x32xf32>, vector<32x128xf32>, vector<16x128xf32> -> vector<16x128xf32>
    %4 = vector.broadcast %2 : vector<1x128xf32> to vector<16x128xf32>
    %5 = arith.addf %3, %4 : vector<16x128xf32>
    %cst_5 = arith.constant 0.000000e+00 : f32
    %6 = vector.broadcast %cst_5 : f32 to vector<16x128xf32>
    %7 = arith.maximumf %5, %6 : vector<16x128xf32>
    %c0_6 = arith.constant 0 : index
    %c0_7 = arith.constant 0 : index
    %c0_8 = arith.constant 0 : index
    %8 = vector.load %arg4[%c0_6, %c0_7, %c0_8] : memref<2x128x128xf32, #tpu.memory_space<vmem>>, vector<1x128x128xf32>
    %9 = vector.shape_cast %8 : vector<1x128x128xf32> to vector<128x128xf32>
    %c0_9 = arith.constant 0 : index
    %c0_10 = arith.constant 0 : index
    %c0_11 = arith.constant 0 : index
    %10 = vector.load %arg5[%c0_9, %c0_10, %c0_11] : memref<2x1x128xf32, #tpu.memory_space<vmem>>, vector<1x1x128xf32>
    %11 = vector.shape_cast %10 : vector<1x1x128xf32> to vector<1x128xf32>
    %cst_12 = arith.constant dense<0.000000e+00> : vector<16x128xf32>
    %12 = tpu.matmul %7, %9, %cst_12 {dimension_numbers = #tpu.dot_dimension_numbers<[1], [0], [0], [1], [0, 0, 1, 1], [], []>} : vector<16x128xf32>, vector<128x128xf32>, vector<16x128xf32> -> vector<16x128xf32>
    %13 = vector.broadcast %11 : vector<1x128xf32> to vector<16x128xf32>
    %14 = arith.addf %12, %13 : vector<16x128xf32>
    %cst_13 = arith.constant 0.000000e+00 : f32
    %15 = vector.broadcast %cst_13 : f32 to vector<16x128xf32>
    %16 = arith.maximumf %14, %15 : vector<16x128xf32>
    %c1 = arith.constant 1 : index
    %c0_14 = arith.constant 0 : index
    %c0_15 = arith.constant 0 : index
    %17 = vector.load %arg4[%c1, %c0_14, %c0_15] : memref<2x128x128xf32, #tpu.memory_space<vmem>>, vector<1x128x128xf32>
    %18 = vector.shape_cast %17 : vector<1x128x128xf32> to vector<128x128xf32>
    %c1_16 = arith.constant 1 : index
    %c0_17 = arith.constant 0 : index
    %c0_18 = arith.constant 0 : index
    %19 = vector.load %arg5[%c1_16, %c0_17, %c0_18] : memref<2x1x128xf32, #tpu.memory_space<vmem>>, vector<1x1x128xf32>
    %20 = vector.shape_cast %19 : vector<1x1x128xf32> to vector<1x128xf32>
    %cst_19 = arith.constant dense<0.000000e+00> : vector<16x128xf32>
    %21 = tpu.matmul %16, %18, %cst_19 {dimension_numbers = #tpu.dot_dimension_numbers<[1], [0], [0], [1], [0, 0, 1, 1], [], []>} : vector<16x128xf32>, vector<128x128xf32>, vector<16x128xf32> -> vector<16x128xf32>
    %22 = vector.broadcast %20 : vector<1x128xf32> to vector<16x128xf32>
    %23 = arith.addf %21, %22 : vector<16x128xf32>
    %cst_20 = arith.constant 0.000000e+00 : f32
    %24 = vector.broadcast %cst_20 : f32 to vector<16x128xf32>
    %25 = arith.maximumf %23, %24 : vector<16x128xf32>
    %c0_21 = arith.constant 0 : index
    %c0_22 = arith.constant 0 : index
    %26 = vector.load %arg6[%c0_21, %c0_22] : memref<128x128xf32, #tpu.memory_space<vmem>>, vector<128x128xf32>
    %cst_23 = arith.constant dense<0.000000e+00> : vector<16x128xf32>
    %27 = tpu.matmul %25, %26, %cst_23 {dimension_numbers = #tpu.dot_dimension_numbers<[1], [0], [0], [1], [0, 0, 1, 1], [], []>} : vector<16x128xf32>, vector<128x128xf32>, vector<16x128xf32> -> vector<16x128xf32>
    %c0_24 = arith.constant 0 : index
    %c0_25 = arith.constant 0 : index
    %28 = vector.load %arg7[%c0_24, %c0_25] : memref<1x128xf32, #tpu.memory_space<vmem>>, vector<1x128xf32>
    %29 = vector.broadcast %28 : vector<1x128xf32> to vector<16x128xf32>
    %30 = arith.addf %27, %29 : vector<16x128xf32>
    %c0_26 = arith.constant 0 : index
    %c0_27 = arith.constant 0 : index
    %31 = vector.load %arg8[%c0_26, %c0_27] : memref<16x128xf32, #tpu.memory_space<vmem>>, vector<16x128xf32>
    tpu.vector_store %arg8[%c0_26, %c0_27], %30 {strides = array<i32>} : memref<16x128xf32, #tpu.memory_space<vmem>>, vector<16x128xf32>,
    return
  }
  func.func @transform_0(%arg0: i32) -> (i32, i32) {
    %c0_i32 = arith.constant 0 : i32
    %c0_i32_0 = arith.constant 0 : i32
    return %arg0, %c0_i32 : i32, i32
  }
  func.func @transform_1(%arg0: i32) -> (i32, i32) {
    %c0_i32 = arith.constant 0 : i32
    %c0_i32_0 = arith.constant 0 : i32
    %c0_i32_1 = arith.constant 0 : i32
    return %c0_i32, %c0_i32_0 : i32, i32
  }
  func.func @transform_2(%arg0: i32) -> (i32, i32) {
    %c0_i32 = arith.constant 0 : i32
    %c0_i32_0 = arith.constant 0 : i32
    %c0_i32_1 = arith.constant 0 : i32
    return %c0_i32, %c0_i32_0 : i32, i32
  }
  func.func @transform_3(%arg0: i32) -> (i32, i32, i32) {
    %c0_i32 = arith.constant 0 : i32
    %c0_i32_0 = arith.constant 0 : i32
    %c0_i32_1 = arith.constant 0 : i32
    %c0_i32_2 = arith.constant 0 : i32
    return %c0_i32, %c0_i32_0, %c0_i32_1 : i32, i32, i32
  }
  func.func @transform_4(%arg0: i32) -> (i32, i32, i32) {
    %c0_i32 = arith.constant 0 : i32
    %c0_i32_0 = arith.constant 0 : i32
    %c0_i32_1 = arith.constant 0 : i32
    %c0_i32_2 = arith.constant 0 : i32
    return %c0_i32, %c0_i32_0, %c0_i32_1 : i32, i32, i32
  }
  func.func @transform_5(%arg0: i32) -> (i32, i32) {
    %c0_i32 = arith.constant 0 : i32
    %c0_i32_0 = arith.constant 0 : i32
    %c0_i32_1 = arith.constant 0 : i32
    return %c0_i32, %c0_i32_0 : i32, i32
  }
  func.func @transform_6(%arg0: i32) -> (i32, i32) {
    %c0_i32 = arith.constant 0 : i32
    %c0_i32_0 = arith.constant 0 : i32
    %c0_i32_1 = arith.constant 0 : i32
    return %c0_i32, %c0_i32_0 : i32, i32
  }
  func.func @transform_7(%arg0: i32) -> (i32, i32) {
    %c0_i32 = arith.constant 0 : i32
    %c0_i32_0 = arith.constant 0 : i32
    return %arg0, %c0_i32 : i32, i32
  }
}

module attributes {stable_mosaic.version = 11 : i64} {
  func.func @_physics_kernel(%arg0: i32, %arg1: memref<16x32xf32, #tpu.memory_space<vmem>>, %arg2: memref<32x128xf32, #tpu.memory_space<vmem>>, %arg3: memref<1x128xf32, #tpu.memory_space<vmem>>, %arg4: memref<2x128x128xf32, #tpu.memory_space<vmem>>, %arg5: memref<2x1x128xf32, #tpu.memory_space<vmem>>, %arg6: memref<128x128xf32, #tpu.memory_space<vmem>>, %arg7: memref<1x128xf32, #tpu.memory_space<vmem>>, %arg8: memref<16x128xf32, #tpu.memory_space<vmem>>) attributes {dimension_semantics = [#tpu.dimension_semantics<parallel>], iteration_bounds = array<i64: 1>, scalar_prefetch = 0 : i64, scratch_operands = 0 : i64, tpu.core_type = #tpu.core_type<tc>, window_params = [{transform_indices = @transform_0, window_bounds = array<i64: 16, 32>}, {pipeline_mode = #tpu.pipeline_mode<synchronous>, transform_indices = @transform_1, window_bounds = array<i64: 32, 128>}, {pipeline_mode = #tpu.pipeline_mode<synchronous>, transform_indices = @transform_2, window_bounds = array<i64: 1, 128>}, {pipeline_mode = #tpu.pipeline_mode<synchronous>, transform_indices = @transform_3, window_bounds = array<i64: 2, 128, 128>}, {pipeline_mode = #tpu.pipeline_mode<synchronous>, transform_indices = @transform_4, window_bounds = array<i64: 2, 1, 128>}, {pipeline_mode = #tpu.pipeline_mode<synchronous>, transform_indices = @transform_5, window_bounds = array<i64: 128, 128>}, {pipeline_mode = #tpu.pipeline_mode<synchronous>, transform_indices = @transform_6, window_bounds = array<i64: 1, 128>}, {transform_indices = @transform_7, window_bounds = array<i64: 16, 128>}]} {
    %c0 = arith.constant 0 : index
    %c0_0 = arith.constant 0 : index
    %0 = vector.load %arg1[%c0, %c0_0] : memref<16x32xf32, #tpu.memory_space<vmem>>, vector<16x32xf32>
    %c0_1 = arith.constant 0 : index
    %c0_2 = arith.constant 0 : index
    %1 = vector.load %arg2[%c0_1, %c0_2] : memref<32x128xf32, #tpu.memory_space<vmem>>, vector<32x128xf32>
    %c0_3 = arith.constant 0 : index
    %c0_4 = arith.constant 0 : index
    %2 = vector.load %arg3[%c0_3, %c0_4] : memref<1x128xf32, #tpu.memory_space<vmem>>, vector<1x128xf32>
    %cst = arith.constant dense<0.000000e+00> : vector<16x128xf32>
    %3 = tpu.matmul %0, %1, %cst {dimension_numbers = #tpu.dot_dimension_numbers<[1], [0], [0], [1], [0, 0, 1, 1], [], []>} : vector<16x32xf32>, vector<32x128xf32>, vector<16x128xf32> -> vector<16x128xf32>
    %4 = vector.broadcast %2 : vector<1x128xf32> to vector<16x128xf32>
    %5 = arith.addf %3, %4 : vector<16x128xf32>
    %cst_5 = arith.constant 0.000000e+00 : f32
    %6 = vector.broadcast %cst_5 : f32 to vector<16x128xf32>
    %7 = arith.maximumf %5, %6 : vector<16x128xf32>
    %c0_6 = arith.constant 0 : index
    %c0_7 = arith.constant 0 : index
    %c0_8 = arith.constant 0 : index
    %8 = vector.load %arg4[%c0_6, %c0_7, %c0_8] : memref<2x128x128xf32, #tpu.memory_space<vmem>>, vector<1x128x128xf32>
    %9 = vector.shape_cast %8 : vector<1x128x128xf32> to vector<128x128xf32>
    %c0_9 = arith.constant 0 : index
    %c0_10 = arith.constant 0 : index
    %c0_11 = arith.constant 0 : index
    %10 = vector.load %arg5[%c0_9, %c0_10, %c0_11] : memref<2x1x128xf32, #tpu.memory_space<vmem>>, vector<1x1x128xf32>
    %11 = vector.shape_cast %10 : vector<1x1x128xf32> to vector<1x128xf32>
    %cst_12 = arith.constant dense<0.000000e+00> : vector<16x128xf32>
    %12 = tpu.matmul %7, %9, %cst_12 {dimension_numbers = #tpu.dot_dimension_numbers<[1], [0], [0], [1], [0, 0, 1, 1], [], []>} : vector<16x128xf32>, vector<128x128xf32>, vector<16x128xf32> -> vector<16x128xf32>
    %13 = vector.broadcast %11 : vector<1x128xf32> to vector<16x128xf32>
    %14 = arith.addf %12, %13 : vector<16x128xf32>
    %cst_13 = arith.constant 0.000000e+00 : f32
    %15 = vector.broadcast %cst_13 : f32 to vector<16x128xf32>
    %16 = arith.maximumf %14, %15 : vector<16x128xf32>
    %c1 = arith.constant 1 : index
    %c0_14 = arith.constant 0 : index
    %c0_15 = arith.constant 0 : index
    %17 = vector.load %arg4[%c1, %c0_14, %c0_15] : memref<2x128x128xf32, #tpu.memory_space<vmem>>, vector<1x128x128xf32>
    %18 = vector.shape_cast %17 : vector<1x128x128xf32> to vector<128x128xf32>
    %c1_16 = arith.constant 1 : index
    %c0_17 = arith.constant 0 : index
    %c0_18 = arith.constant 0 : index
    %19 = vector.load %arg5[%c1_16, %c0_17, %c0_18] : memref<2x1x128xf32, #tpu.memory_space<vmem>>, vector<1x1x128xf32>
    %20 = vector.shape_cast %19 : vector<1x1x128xf32> to vector<1x128xf32>
    %cst_19 = arith.constant dense<0.000000e+00> : vector<16x128xf32>
    %21 = tpu.matmul %16, %18, %cst_19 {dimension_numbers = #tpu.dot_dimension_numbers<[1], [0], [0], [1], [0, 0, 1, 1], [], []>} : vector<16x128xf32>, vector<128x128xf32>, vector<16x128xf32> -> vector<16x128xf32>
    %22 = vector.broadcast %20 : vector<1x128xf32> to vector<16x128xf32>
    %23 = arith.addf %21, %22 : vector<16x128xf32>
    %cst_20 = arith.constant 0.000000e+00 : f32
    %24 = vector.broadcast %cst_20 : f32 to vector<16x128xf32>
    %25 = arith.maximumf %23, %24 : vector<16x128xf32>
    %c0_21 = arith.constant 0 : index
    %c0_22 = arith.constant 0 : index
    %26 = vector.load %arg6[%c0_21, %c0_22] : memref<128x128xf32, #tpu.memory_space<vmem>>, vector<128x128xf32>
    %cst_23 = arith.constant dense<0.000000e+00> : vector<16x128xf32>
    %27 = tpu.matmul %25, %26, %cst_23 {dimension_numbers = #tpu.dot_dimension_numbers<[1], [0], [0], [1], [0, 0, 1, 1], [], []>} : vector<16x128xf32>, vector<128x128xf32>, vector<16x128xf32> -> vector<16x128xf32>
    %c0_24 = arith.constant 0 : index
    %c0_25 = arith.constant 0 : index
    %28 = vector.load %arg7[%c0_24, %c0_25] : memref<1x128xf32, #tpu.memory_space<vmem>>, vector<1x128xf32>
    %29 = vector.broadcast %28 : vector<1x128xf32> to vector<16x128xf32>
    %30 = arith.addf %27, %29 : vector<16x128xf32>
    %c0_26 = arith.constant 0 : index
    %c0_27 = arith.constant 0 : index
    %31 = vector.load %arg8[%c0_26, %c0_27] : memref<16x128xf32, #tpu.memory_space<vmem>>, vector<16x128xf32>
    tpu.vector_store %arg8[%c0_26, %c0_27], %30 {strides = array<i32>} : memref<16x128xf32, #tpu.memory_space<vmem>>, vector<16x128xf32>,
    return
  }
  func.func @transform_0(%arg0: i32) -> (i32, i32) {
    %c0_i32 = arith.constant 0 : i32
    %c0_i32_0 = arith.constant 0 : i32
    return %arg0, %c0_i32 : i32, i32
  }
  func.func @transform_1(%arg0: i32) -> (i32, i32) {
    %c0_i32 = arith.constant 0 : i32
    %c0_i32_0 = arith.constant 0 : i32
    %c0_i32_1 = arith.constant 0 : i32
    return %c0_i32, %c0_i32_0 : i32, i32
  }
  func.func @transform_2(%arg0: i32) -> (i32, i32) {
    %c0_i32 = arith.constant 0 : i32
    %c0_i32_0 = arith.constant 0 : i32
    %c0_i32_1 = arith.constant 0 : i32
    return %c0_i32, %c0_i32_0 : i32, i32
  }
  func.func @transform_3(%arg0: i32) -> (i32, i32, i32) {
    %c0_i32 = arith.constant 0 : i32
    %c0_i32_0 = arith.constant 0 : i32
    %c0_i32_1 = arith.constant 0 : i32
    %c0_i32_2 = arith.constant 0 : i32
    return %c0_i32, %c0_i32_0, %c0_i32_1 : i32, i32, i32
  }
  func.func @transform_4(%arg0: i32) -> (i32, i32, i32) {
    %c0_i32 = arith.constant 0 : i32
    %c0_i32_0 = arith.constant 0 : i32
    %c0_i32_1 = arith.constant 0 : i32
    %c0_i32_2 = arith.constant 0 : i32
    return %c0_i32, %c0_i32_0, %c0_i32_1 : i32, i32, i32
  }
  func.func @transform_5(%arg0: i32) -> (i32, i32) {
    %c0_i32 = arith.constant 0 : i32
    %c0_i32_0 = arith.constant 0 : i32
    %c0_i32_1 = arith.constant 0 : i32
    return %c0_i32, %c0_i32_0 : i32, i32
  }
  func.func @transform_6(%arg0: i32) -> (i32, i32) {
    %c0_i32 = arith.constant 0 : i32
    %c0_i32_0 = arith.constant 0 : i32
    %c0_i32_1 = arith.constant 0 : i32
    return %c0_i32, %c0_i32_0 : i32, i32
  }
  func.func @transform_7(%arg0: i32) -> (i32, i32) {
    %c0_i32 = arith.constant 0 : i32
    %c0_i32_0 = arith.constant 0 : i32
    return %arg0, %c0_i32 : i32, i32
  }
}

</mosaic_0001>

<llo_original>
// kernel: tpu_custom_call.1
$region0: #{tpu_custom_call.1}
  #allocation0 [shape = 'u32[]', space=smem, size = 0x4, offset = 0x4, fixed_abs, tag = 'smem constant byte address 0x4 - core index']
  #allocation1 [shape = 'u32[144,128]{1,0:T(1,128)}', space=vmem, size = 0x12000, scoped, tag = 'internal scratch']
  %s0 = inlined_call_operand.hbm [shape: f32[16,32], index: 0, kind: input, shape index: {}]
  %s1 = inlined_call_operand.hbm [shape: f32[32,128], index: 1, kind: input, shape index: {}]
  %s2 = inlined_call_operand.vmem [shape: f32[1,128], index: 2, kind: input, shape index: {}]
  %s3 = inlined_call_operand.hbm [shape: f32[2,128,128], index: 3, kind: input, shape index: {}]
  %s4 = inlined_call_operand.vmem [shape: f32[2,1,128], index: 4, kind: input, shape index: {}]
  %s5 = inlined_call_operand.hbm [shape: f32[128,128], index: 5, kind: input, shape index: {}]
  %s6 = inlined_call_operand.vmem [shape: f32[1,128], index: 6, kind: input, shape index: {}]
  %s7 = inlined_call_operand.hbm [shape: f32[16,128], index: 7, kind: output, shape index: {}]
  %s8 = sld [smem:[#allocation0]]
  $region54: #{tpu_custom_call.1} parent=0
    _
  %s10 = ssub.s32 1, %s8
  %s11 = scalar_select 0, %s10, %s8
  $region1: #{tpu_custom_call.1} parent=0
    #allocation2 [shape = 'u8[8192]{0}', space=vmem, size = 0x2000, scoped, tag = 'input window, operand 0, single buffered']
    #allocation3 [shape = 's32[1]{0}', space=sflag, size = 0x4, scoped, tag = 'scoped memory for tpu_custom_call.1']
    #allocation4 [shape = 's32[1]{0}', space=sflag, size = 0x4, scoped, tag = 'scoped memory for tpu_custom_call.1']
    #allocation5 [shape = 'u8[16384]{0}', space=vmem, size = 0x4000, scoped, tag = 'input window, operand 1, single buffered']
    #allocation6 [shape = 's32[1]{0}', space=sflag, size = 0x4, scoped, tag = 'scoped memory for tpu_custom_call.1']
    #allocation7 [shape = 'u8[131072]{0}', space=vmem, size = 0x20000, scoped, tag = 'input window, operand 3, single buffered']
    #allocation8 [shape = 'u8[65536]{0}', space=vmem, size = 0x10000, scoped, tag = 'input window, operand 5, single buffered']
    #allocation9 [shape = 's32[1]{0}', space=sflag, size = 0x4, scoped, tag = 'scoped memory for tpu_custom_call.1']
    #allocation10 [shape = 'u8[8192]{0}', space=vmem, size = 0x2000, scoped, tag = 'output window, operand 0, single buffered']
    %12 = vsyncpa [#allocation3], 0
    %13 = vsyncpa [#allocation6], 0
    %14 = vsyncpa [#allocation9], 0
    %15 = vsyncpa [#allocation4], 0
    // Predicated region
    $region2: #{tpu_custom_call.1} parent=1 // pred_check
      _
    $region3: #{tpu_custom_call.1} parent=1 // pred_check_branch
      %17 = sbr.rel (0) target = $region5
    $region4: #{tpu_custom_call.1} parent=1 // pred_region
      %s19 = ssub.s32 256, 256
      %20 = vsyncadd [#allocation3], %s19
      %s21 = sshll.u32 [#allocation2], 4
      %s22 = int_to_ptr.vmem [resolvable:$true] %s21
      %27 = dma.hbm_to_vmem [thread:$0]  %s0, 256, %s22, [#allocation3], 128, 128, 8
    $region5: #{tpu_custom_call.1} parent=1 // pred_fallthru
      _
    // Predicated region
    $region6: #{tpu_custom_call.1} parent=1 // pred_check
      _
    $region7: #{tpu_custom_call.1} parent=1 // pred_check_branch
      %29 = sbr.rel (0) target = $region9
    $region8: #{tpu_custom_call.1} parent=1 // pred_region
      %s31 = ssub.s32 512, 512
      %32 = vsyncadd [#allocation6], %s31
      %s33 = sshll.u32 [#allocation5], 4
      %s34 = int_to_ptr.vmem [resolvable:$true] %s33
      %39 = dma.hbm_to_vmem [thread:$0]  %s1, 512, %s34, [#allocation6], 128, 128, 8
    $region9: #{tpu_custom_call.1} parent=1 // pred_fallthru
      _
    // Predicated region
    $region10: #{tpu_custom_call.1} parent=1 // pred_check
      _
    $region11: #{tpu_custom_call.1} parent=1 // pred_check_branch
      %41 = sbr.rel (0) target = $region13
    $region12: #{tpu_custom_call.1} parent=1 // pred_region
      _
    $region13: #{tpu_custom_call.1} parent=1 // pred_fallthru
      _
    // Predicated region
    $region14: #{tpu_custom_call.1} parent=1 // pred_check
      _
    $region15: #{tpu_custom_call.1} parent=1 // pred_check_branch
      %43 = sbr.rel (0) target = $region17
    $region16: #{tpu_custom_call.1} parent=1 // pred_region
      %s45 = ssub.s32 4096, 4096
      %46 = vsyncadd [#allocation6], %s45
      %s47 = sshll.u32 [#allocation7], 4
      %s48 = int_to_ptr.vmem [resolvable:$true] %s47
      %53 = dma.hbm_to_vmem [thread:$0]  %s3, 4096, %s48, [#allocation6], 128, 128, 8
    $region17: #{tpu_custom_call.1} parent=1 // pred_fallthru
      _
    // Predicated region
    $region18: #{tpu_custom_call.1} parent=1 // pred_check
      _
    $region19: #{tpu_custom_call.1} parent=1 // pred_check_branch
      %55 = sbr.rel (0) target = $region21
    $region20: #{tpu_custom_call.1} parent=1 // pred_region
      _
    $region21: #{tpu_custom_call.1} parent=1 // pred_fallthru
      _
    // Predicated region
    $region22: #{tpu_custom_call.1} parent=1 // pred_check
      _
    $region23: #{tpu_custom_call.1} parent=1 // pred_check_branch
      %57 = sbr.rel (0) target = $region25
    $region24: #{tpu_custom_call.1} parent=1 // pred_region
      %s59 = ssub.s32 2048, 2048
      %60 = vsyncadd [#allocation9], %s59
      %s61 = sshll.u32 [#allocation8], 4
      %s62 = int_to_ptr.vmem [resolvable:$true] %s61
      %67 = dma.hbm_to_vmem [thread:$0]  %s5, 2048, %s62, [#allocation9], 128, 128, 8
    $region25: #{tpu_custom_call.1} parent=1 // pred_fallthru
      _
    // Predicated region
    $region26: #{tpu_custom_call.1} parent=1 // pred_check
      _
    $region27: #{tpu_custom_call.1} parent=1 // pred_check_branch
      %69 = sbr.rel (0) target = $region29
    $region28: #{tpu_custom_call.1} parent=1 // pred_region
      _
    $region29: #{tpu_custom_call.1} parent=1 // pred_fallthru
      _
    // Predicated region
    $region30: #{tpu_custom_call.1} parent=1 // pred_check
      _
    $region31: #{tpu_custom_call.1} parent=1 // pred_check_branch
      %71 = sbr.rel (0) target = $region33
    $region32: #{tpu_custom_call.1} parent=1 // pred_region
      %72 = dma.done [#allocation3], 256
    $region33: #{tpu_custom_call.1} parent=1 // pred_fallthru
      _
    // Predicated region
    $region34: #{tpu_custom_call.1} parent=1 // pred_check
      _
    $region35: #{tpu_custom_call.1} parent=1 // pred_check_branch
      %74 = sbr.rel (0) target = $region37
    $region36: #{tpu_custom_call.1} parent=1 // pred_region
      %75 = dma.done [#allocation6], 512
    $region37: #{tpu_custom_call.1} parent=1 // pred_fallthru
      _
    // Predicated region
    $region38: #{tpu_custom_call.1} parent=1 // pred_check
      _
    $region39: #{tpu_custom_call.1} parent=1 // pred_check_branch
      %77 = sbr.rel (0) target = $region41
    $region40: #{tpu_custom_call.1} parent=1 // pred_region
      %78 = dma.done [#allocation6], 4096
    $region41: #{tpu_custom_call.1} parent=1 // pred_fallthru
      _
    // Predicated region
    $region42: #{tpu_custom_call.1} parent=1 // pred_check
      _
    $region43: #{tpu_custom_call.1} parent=1 // pred_check_branch
      %80 = sbr.rel (0) target = $region45
    $region44: #{tpu_custom_call.1} parent=1 // pred_region
      %81 = dma.done [#allocation9], 2048
    $region45: #{tpu_custom_call.1} parent=1 // pred_fallthru
      _
    %v82 = vld [vmem:[#allocation2] sm:$0xff]
    %v83 = vld [vmem:[#allocation2 + $0x8] sm:$0xff]
    %v84 = vld [vmem:[#allocation5] sm:$0xff]
    %v85 = vld [vmem:[#allocation5 + $0x8] sm:$0xff]
    %v86 = vld [vmem:[#allocation5 + $0x10] sm:$0xff]
    %v87 = vld [vmem:[#allocation5 + $0x18] sm:$0xff]
    %v88 = vld [vmem:[%s2] sm:$0x1]
    %v90 = vlaneseq
    %v91 = vshrl.u32 %v90, 7
    %v92 = vsub.s32 0, %v91
    %v93 = vrot.slane %v88, %v92
    %vm95 = vcmask 261120
    %v97 = vsel %vm95, %v82, 0
    %v100 = vsel %vm95, %v83, 0
    %102 = vmatprep.subr.mxu0 0.0
    %103 = vmatpush1.msra.mxu0 0.0
    %104 = vmatprep.subr.mxu0 0.0
    %105 = vmatpush1.msra.mxu0 0.0
    %106 = vmatprep.subr.mxu0 0.0
    %107 = vmatpush1.msra.mxu0 0.0
    %108 = vmatprep.subr.mxu0 0.0
    %109 = vmatpush1.msra.mxu0 0.0
    %110 = vmatprep.subr.mxu0 0.0
    %111 = vmatpush1.msra.mxu0 0.0
    %112 = vmatprep.subr.mxu0 0.0
    %113 = vmatpush1.msra.mxu0 0.0
    %114 = vmatprep.subr.mxu0 0.0
    %115 = vmatpush1.msra.mxu0 0.0
    %116 = vmatprep.subr.mxu0 0.0
    %117 = vmatpush1.msra.mxu0 0.0
    %118 = vmatprep.subr.mxu0 0.0
    %119 = vmatpush1.msra.mxu0 0.0
    %120 = vmatprep.subr.mxu0 0.0
    %121 = vmatpush1.msra.mxu0 0.0
    %122 = vmatprep.subr.mxu0 0.0
    %123 = vmatpush1.msra.mxu0 0.0
    %124 = vmatprep.subr.mxu0 0.0
    %125 = vmatpush1.msra.mxu0 0.0
    %126 = vmatprep.subr.mxu0 0.0
    %127 = vmatpush1.msra.mxu0 %v87
    %128 = vmatprep.subr.mxu0 0.0
    %129 = vmatpush1.msra.mxu0 %v86
    %130 = vmatprep.subr.mxu0 0.0
    %131 = vmatpush1.msra.mxu0 %v85
    %132 = vmatprep.subr.mxu0 0.0
    %133 = vmatpush1.msra.mxu0 %v84
    %134 = vmatprep.subr.mxu0 0.0
    %135 = vmatpush2.msra.mxu0 0.0
    %136 = vmatprep.subr.mxu0 0.0
    %137 = vmatpush2.msra.mxu0 0.0
    %138 = vmatprep.subr.mxu0 0.0
    %139 = vmatpush2.msra.mxu0 0.0
    %140 = vmatprep.subr.mxu0 0.0
    %141 = vmatpush2.msra.mxu0 0.0
    %142 = vmatprep.subr.mxu0 0.0
    %143 = vmatpush2.msra.mxu0 0.0
    %144 = vmatprep.subr.mxu0 0.0
    %145 = vmatpush2.msra.mxu0 0.0
    %146 = vmatprep.subr.mxu0 0.0
    %147 = vmatpush2.msra.mxu0 0.0
    %148 = vmatprep.subr.mxu0 0.0
    %149 = vmatpush2.msra.mxu0 0.0
    %150 = vmatprep.subr.mxu0 0.0
    %151 = vmatpush2.msra.mxu0 0.0
    %152 = vmatprep.subr.mxu0 0.0
    %153 = vmatpush2.msra.mxu0 0.0
    %154 = vmatprep.subr.mxu0 0.0
    %155 = vmatpush2.msra.mxu0 0.0
    %156 = vmatprep.subr.mxu0 0.0
    %157 = vmatpush2.msra.mxu0 0.0
    %158 = vmatprep.subr.mxu0 0.0
    %159 = vmatpush2.msra.mxu0 0.0
    %160 = vmatprep.subr.mxu0 0.0
    %161 = vmatpush2.msra.mxu0 0.0
    %162 = vmatprep.subr.mxu0 0.0
    %163 = vmatpush2.msra.mxu0 0.0
    %164 = vmatprep.subr.mxu0 0.0
    %165 = vmatpush2.msra.mxu0 0.0
    %166 = vmatprep.mubr.f32.mxu0 0.0
    %167 = vmatmul.mubr.f32.gmra.mxu0 %v97
    %v168 = vpop.f32.mrf.mxu0
    %v169 = vadd.f32 %v93, %v168
    %v170 = vpop.f32.mrf.mxu0
    %171 = vmatprep.mubr.f32.mxu0 0.0
    %172 = vmatmul.mubr.f32.gmra.mxu0 %v100
    %v173 = vpop.f32.mrf.mxu0
    %v174 = vadd.f32 %v93, %v173
    %v175 = vpop.f32.mrf.mxu0
    %176 = vdwg.mxu0
    %v177 = vmax.f32 %v169, 0.0
    %v178 = vmax.f32 %v174, 0.0
    %v179 = vld [vmem:[#allocation7] sm:$0xff]
    %v180 = vld [vmem:[#allocation7 + $0x8] sm:$0xff]
    %v181 = vld [vmem:[#allocation7 + $0x10] sm:$0xff]
    %v182 = vld [vmem:[#allocation7 + $0x18] sm:$0xff]
    %v183 = vld [vmem:[#allocation7 + $0x20] sm:$0xff]
    %v184 = vld [vmem:[#allocation7 + $0x28] sm:$0xff]
    %v185 = vld [vmem:[#allocation7 + $0x30] sm:$0xff]
    %v186 = vld [vmem:[#allocation7 + $0x38] sm:$0xff]
    %v187 = vld [vmem:[#allocation7 + $0x40] sm:$0xff]
    %v188 = vld [vmem:[#allocation7 + $0x48] sm:$0xff]
    %v189 = vld [vmem:[#allocation7 + $0x50] sm:$0xff]
    %v190 = vld [vmem:[#allocation7 + $0x58] sm:$0xff]
    %v191 = vld [vmem:[#allocation7 + $0x60] sm:$0xff]
    %v192 = vld [vmem:[#allocation7 + $0x68] sm:$0xff]
    %v193 = vld [vmem:[#allocation7 + $0x70] sm:$0xff]
    %v194 = vld [vmem:[#allocation7 + $0x78] sm:$0xff]
    %v195 = vld [vmem:[%s4] sm:$0x1]
    %v197 = vlaneseq
    %v198 = vshrl.u32 %v197, 7
    %v199 = vsub.s32 0, %v198
    %v200 = vrot.slane %v195, %v199
    %202 = vmatprep.subr.mxu0 0.0
    %203 = vmatpush1.msra.mxu0 %v194
    %204 = vmatprep.subr.mxu0 0.0
    %205 = vmatpush1.msra.mxu0 %v193
    %206 = vmatprep.subr.mxu0 0.0
    %207 = vmatpush1.msra.mxu0 %v192
    %208 = vmatprep.subr.mxu0 0.0
    %209 = vmatpush1.msra.mxu0 %v191
    %210 = vmatprep.subr.mxu0 0.0
    %211 = vmatpush1.msra.mxu0 %v190
    %212 = vmatprep.subr.mxu0 0.0
    %213 = vmatpush1.msra.mxu0 %v189
    %214 = vmatprep.subr.mxu0 0.0
    %215 = vmatpush1.msra.mxu0 %v188
    %216 = vmatprep.subr.mxu0 0.0
    %217 = vmatpush1.msra.mxu0 %v187
    %218 = vmatprep.subr.mxu0 0.0
    %219 = vmatpush1.msra.mxu0 %v186
    %220 = vmatprep.subr.mxu0 0.0
    %221 = vmatpush1.msra.mxu0 %v185
    %222 = vmatprep.subr.mxu0 0.0
    %223 = vmatpush1.msra.mxu0 %v184
    %224 = vmatprep.subr.mxu0 0.0
    %225 = vmatpush1.msra.mxu0 %v183
    %226 = vmatprep.subr.mxu0 0.0
    %227 = vmatpush1.msra.mxu0 %v182
    %228 = vmatprep.subr.mxu0 0.0
    %229 = vmatpush1.msra.mxu0 %v181
    %230 = vmatprep.subr.mxu0 0.0
    %231 = vmatpush1.msra.mxu0 %v180
    %232 = vmatprep.subr.mxu0 0.0
    %233 = vmatpush1.msra.mxu0 %v179
    %234 = vmatprep.subr.mxu0 0.0
    %235 = vmatpush2.msra.mxu0 0.0
    %236 = vmatprep.subr.mxu0 0.0
    %237 = vmatpush2.msra.mxu0 0.0
    %238 = vmatprep.subr.mxu0 0.0
    %239 = vmatpush2.msra.mxu0 0.0
    %240 = vmatprep.subr.mxu0 0.0
    %241 = vmatpush2.msra.mxu0 0.0
    %242 = vmatprep.subr.mxu0 0.0
    %243 = vmatpush2.msra.mxu0 0.0
    %244 = vmatprep.subr.mxu0 0.0
    %245 = vmatpush2.msra.mxu0 0.0
    %246 = vmatprep.subr.mxu0 0.0
    %247 = vmatpush2.msra.mxu0 0.0
    %248 = vmatprep.subr.mxu0 0.0
    %249 = vmatpush2.msra.mxu0 0.0
    %250 = vmatprep.subr.mxu0 0.0
    %251 = vmatpush2.msra.mxu0 0.0
    %252 = vmatprep.subr.mxu0 0.0
    %253 = vmatpush2.msra.mxu0 0.0
    %254 = vmatprep.subr.mxu0 0.0
    %255 = vmatpush2.msra.mxu0 0.0
    %256 = vmatprep.subr.mxu0 0.0
    %257 = vmatpush2.msra.mxu0 0.0
    %258 = vmatprep.subr.mxu0 0.0
    %259 = vmatpush2.msra.mxu0 0.0
    %260 = vmatprep.subr.mxu0 0.0
    %261 = vmatpush2.msra.mxu0 0.0
    %262 = vmatprep.subr.mxu0 0.0
    %263 = vmatpush2.msra.mxu0 0.0
    %264 = vmatprep.subr.mxu0 0.0
    %265 = vmatpush2.msra.mxu0 0.0
    %266 = vmatprep.mubr.f32.mxu0 0.0
    %267 = vmatmul.mubr.f32.gmra.mxu0 %v177
    %v268 = vpop.f32.mrf.mxu0
    %v269 = vadd.f32 %v200, %v268
    %v270 = vpop.f32.mrf.mxu0
    %271 = vmatprep.mubr.f32.mxu0 0.0
    %272 = vmatmul.mubr.f32.gmra.mxu0 %v178
    %v273 = vpop.f32.mrf.mxu0
    %v274 = vadd.f32 %v200, %v273
    %v275 = vpop.f32.mrf.mxu0
    %276 = vdwg.mxu0
    %v277 = vmax.f32 %v269, 0.0
    %v278 = vmax.f32 %v274, 0.0
    %s279 = scalar_lea.vmem [#allocation7], 128
    %v280 = vld [vmem:[%s279] sm:$0xff]
    %v281 = vld [vmem:[%s279 + $0x8] sm:$0xff]
    %v282 = vld [vmem:[%s279 + $0x10] sm:$0xff]
    %v283 = vld [vmem:[%s279 + $0x18] sm:$0xff]
    %v284 = vld [vmem:[%s279 + $0x20] sm:$0xff]
    %v285 = vld [vmem:[%s279 + $0x28] sm:$0xff]
    %v286 = vld [vmem:[%s279 + $0x30] sm:$0xff]
    %v287 = vld [vmem:[%s279 + $0x38] sm:$0xff]
    %v288 = vld [vmem:[%s279 + $0x40] sm:$0xff]
    %v289 = vld [vmem:[%s279 + $0x48] sm:$0xff]
    %v290 = vld [vmem:[%s279 + $0x50] sm:$0xff]
    %v291 = vld [vmem:[%s279 + $0x58] sm:$0xff]
    %v292 = vld [vmem:[%s279 + $0x60] sm:$0xff]
    %v293 = vld [vmem:[%s279 + $0x68] sm:$0xff]
    %v294 = vld [vmem:[%s279 + $0x70] sm:$0xff]
    %v295 = vld [vmem:[%s279 + $0x78] sm:$0xff]
    %s296 = scalar_lea.vmem %s4, 1
    %v297 = vld [vmem:[%s296] sm:$0x1]
    %v299 = vlaneseq
    %v300 = vshrl.u32 %v299, 7
    %v301 = vsub.s32 0, %v300
    %v302 = vrot.slane %v297, %v301
    %304 = vmatprep.subr.mxu0 0.0
    %305 = vmatpush1.msra.mxu0 %v295
    %306 = vmatprep.subr.mxu0 0.0
    %307 = vmatpush1.msra.mxu0 %v294
    %308 = vmatprep.subr.mxu0 0.0
    %309 = vmatpush1.msra.mxu0 %v293
    %310 = vmatprep.subr.mxu0 0.0
    %311 = vmatpush1.msra.mxu0 %v292
    %312 = vmatprep.subr.mxu0 0.0
    %313 = vmatpush1.msra.mxu0 %v291
    %314 = vmatprep.subr.mxu0 0.0
    %315 = vmatpush1.msra.mxu0 %v290
    %316 = vmatprep.subr.mxu0 0.0
    %317 = vmatpush1.msra.mxu0 %v289
    %318 = vmatprep.subr.mxu0 0.0
    %319 = vmatpush1.msra.mxu0 %v288
    %320 = vmatprep.subr.mxu0 0.0
    %321 = vmatpush1.msra.mxu0 %v287
    %322 = vmatprep.subr.mxu0 0.0
    %323 = vmatpush1.msra.mxu0 %v286
    %324 = vmatprep.subr.mxu0 0.0
    %325 = vmatpush1.msra.mxu0 %v285
    %326 = vmatprep.subr.mxu0 0.0
    %327 = vmatpush1.msra.mxu0 %v284
    %328 = vmatprep.subr.mxu0 0.0
    %329 = vmatpush1.msra.mxu0 %v283
    %330 = vmatprep.subr.mxu0 0.0
    %331 = vmatpush1.msra.mxu0 %v282
    %332 = vmatprep.subr.mxu0 0.0
    %333 = vmatpush1.msra.mxu0 %v281
    %334 = vmatprep.subr.mxu0 0.0
    %335 = vmatpush1.msra.mxu0 %v280
    %336 = vmatprep.subr.mxu0 0.0
    %337 = vmatpush2.msra.mxu0 0.0
    %338 = vmatprep.subr.mxu0 0.0
    %339 = vmatpush2.msra.mxu0 0.0
    %340 = vmatprep.subr.mxu0 0.0
    %341 = vmatpush2.msra.mxu0 0.0
    %342 = vmatprep.subr.mxu0 0.0
    %343 = vmatpush2.msra.mxu0 0.0
    %344 = vmatprep.subr.mxu0 0.0
    %345 = vmatpush2.msra.mxu0 0.0
    %346 = vmatprep.subr.mxu0 0.0
    %347 = vmatpush2.msra.mxu0 0.0
    %348 = vmatprep.subr.mxu0 0.0
    %349 = vmatpush2.msra.mxu0 0.0
    %350 = vmatprep.subr.mxu0 0.0
    %351 = vmatpush2.msra.mxu0 0.0
    %352 = vmatprep.subr.mxu0 0.0
    %353 = vmatpush2.msra.mxu0 0.0
    %354 = vmatprep.subr.mxu0 0.0
    %355 = vmatpush2.msra.mxu0 0.0
    %356 = vmatprep.subr.mxu0 0.0
    %357 = vmatpush2.msra.mxu0 0.0
    %358 = vmatprep.subr.mxu0 0.0
    %359 = vmatpush2.msra.mxu0 0.0
    %360 = vmatprep.subr.mxu0 0.0
    %361 = vmatpush2.msra.mxu0 0.0
    %362 = vmatprep.subr.mxu0 0.0
    %363 = vmatpush2.msra.mxu0 0.0
    %364 = vmatprep.subr.mxu0 0.0
    %365 = vmatpush2.msra.mxu0 0.0
    %366 = vmatprep.subr.mxu0 0.0
    %367 = vmatpush2.msra.mxu0 0.0
    %368 = vmatprep.mubr.f32.mxu0 0.0
    %369 = vmatmul.mubr.f32.gmra.mxu0 %v277
    %v370 = vpop.f32.mrf.mxu0
    %v371 = vadd.f32 %v302, %v370
    %v372 = vpop.f32.mrf.mxu0
    %373 = vmatprep.mubr.f32.mxu0 0.0
    %374 = vmatmul.mubr.f32.gmra.mxu0 %v278
    %v375 = vpop.f32.mrf.mxu0
    %v376 = vadd.f32 %v302, %v375
    %v377 = vpop.f32.mrf.mxu0
    %378 = vdwg.mxu0
    %v379 = vmax.f32 %v371, 0.0
    %v380 = vmax.f32 %v376, 0.0
    %v381 = vld [vmem:[#allocation8] sm:$0xff]
    %v382 = vld [vmem:[#allocation8 + $0x8] sm:$0xff]
    %v383 = vld [vmem:[#allocation8 + $0x10] sm:$0xff]
    %v384 = vld [vmem:[#allocation8 + $0x18] sm:$0xff]
    %v385 = vld [vmem:[#allocation8 + $0x20] sm:$0xff]
    %v386 = vld [vmem:[#allocation8 + $0x28] sm:$0xff]
    %v387 = vld [vmem:[#allocation8 + $0x30] sm:$0xff]
    %v388 = vld [vmem:[#allocation8 + $0x38] sm:$0xff]
    %v389 = vld [vmem:[#allocation8 + $0x40] sm:$0xff]
    %v390 = vld [vmem:[#allocation8 + $0x48] sm:$0xff]
    %v391 = vld [vmem:[#allocation8 + $0x50] sm:$0xff]
    %v392 = vld [vmem:[#allocation8 + $0x58] sm:$0xff]
    %v393 = vld [vmem:[#allocation8 + $0x60] sm:$0xff]
    %v394 = vld [vmem:[#allocation8 + $0x68] sm:$0xff]
    %v395 = vld [vmem:[#allocation8 + $0x70] sm:$0xff]
    %v396 = vld [vmem:[#allocation8 + $0x78] sm:$0xff]
    %v397 = vld [vmem:[%s6] sm:$0x1]
    %v399 = vlaneseq
    %v400 = vshrl.u32 %v399, 7
    %v401 = vsub.s32 0, %v400
    %v402 = vrot.slane %v397, %v401
    %404 = vmatprep.subr.mxu0 0.0
    %405 = vmatpush1.msra.mxu0 %v396
    %406 = vmatprep.subr.mxu0 0.0
    %407 = vmatpush1.msra.mxu0 %v395
    %408 = vmatprep.subr.mxu0 0.0
    %409 = vmatpush1.msra.mxu0 %v394
    %410 = vmatprep.subr.mxu0 0.0
    %411 = vmatpush1.msra.mxu0 %v393
    %412 = vmatprep.subr.mxu0 0.0
    %413 = vmatpush1.msra.mxu0 %v392
    %414 = vmatprep.subr.mxu0 0.0
    %415 = vmatpush1.msra.mxu0 %v391
    %416 = vmatprep.subr.mxu0 0.0
    %417 = vmatpush1.msra.mxu0 %v390
    %418 = vmatprep.subr.mxu0 0.0
    %419 = vmatpush1.msra.mxu0 %v389
    %420 = vmatprep.subr.mxu0 0.0
    %421 = vmatpush1.msra.mxu0 %v388
    %422 = vmatprep.subr.mxu0 0.0
    %423 = vmatpush1.msra.mxu0 %v387
    %424 = vmatprep.subr.mxu0 0.0
    %425 = vmatpush1.msra.mxu0 %v386
    %426 = vmatprep.subr.mxu0 0.0
    %427 = vmatpush1.msra.mxu0 %v385
    %428 = vmatprep.subr.mxu0 0.0
    %429 = vmatpush1.msra.mxu0 %v384
    %430 = vmatprep.subr.mxu0 0.0
    %431 = vmatpush1.msra.mxu0 %v383
    %432 = vmatprep.subr.mxu0 0.0
    %433 = vmatpush1.msra.mxu0 %v382
    %434 = vmatprep.subr.mxu0 0.0
    %435 = vmatpush1.msra.mxu0 %v381
    %436 = vmatprep.subr.mxu0 0.0
    %437 = vmatpush2.msra.mxu0 0.0
    %438 = vmatprep.subr.mxu0 0.0
    %439 = vmatpush2.msra.mxu0 0.0
    %440 = vmatprep.subr.mxu0 0.0
    %441 = vmatpush2.msra.mxu0 0.0
    %442 = vmatprep.subr.mxu0 0.0
    %443 = vmatpush2.msra.mxu0 0.0
    %444 = vmatprep.subr.mxu0 0.0
    %445 = vmatpush2.msra.mxu0 0.0
    %446 = vmatprep.subr.mxu0 0.0
    %447 = vmatpush2.msra.mxu0 0.0
    %448 = vmatprep.subr.mxu0 0.0
    %449 = vmatpush2.msra.mxu0 0.0
    %450 = vmatprep.subr.mxu0 0.0
    %451 = vmatpush2.msra.mxu0 0.0
    %452 = vmatprep.subr.mxu0 0.0
    %453 = vmatpush2.msra.mxu0 0.0
    %454 = vmatprep.subr.mxu0 0.0
    %455 = vmatpush2.msra.mxu0 0.0
    %456 = vmatprep.subr.mxu0 0.0
    %457 = vmatpush2.msra.mxu0 0.0
    %458 = vmatprep.subr.mxu0 0.0
    %459 = vmatpush2.msra.mxu0 0.0
    %460 = vmatprep.subr.mxu0 0.0
    %461 = vmatpush2.msra.mxu0 0.0
    %462 = vmatprep.subr.mxu0 0.0
    %463 = vmatpush2.msra.mxu0 0.0
    %464 = vmatprep.subr.mxu0 0.0
    %465 = vmatpush2.msra.mxu0 0.0
    %466 = vmatprep.subr.mxu0 0.0
    %467 = vmatpush2.msra.mxu0 0.0
    %468 = vmatprep.mubr.f32.mxu0 0.0
    %469 = vmatmul.mubr.f32.gmra.mxu0 %v379
    %v470 = vpop.f32.mrf.mxu0
    %v471 = vadd.f32 %v402, %v470
    %v472 = vpop.f32.mrf.mxu0
    %473 = vmatprep.mubr.f32.mxu0 0.0
    %474 = vmatmul.mubr.f32.gmra.mxu0 %v380
    %v475 = vpop.f32.mrf.mxu0
    %v476 = vadd.f32 %v402, %v475
    %v477 = vpop.f32.mrf.mxu0
    %478 = vdwg.mxu0
    %479 = vst [vmem:[#allocation10] sm:$0xff] %v471
    %480 = vst [vmem:[#allocation10 + $0x8] sm:$0xff] %v476
    // Predicated region
    $region46: #{tpu_custom_call.1} parent=1 // pred_check
      _
    $region47: #{tpu_custom_call.1} parent=1 // pred_check_branch
      %482 = sbr.rel (0) target = $region49
    $region48: #{tpu_custom_call.1} parent=1 // pred_region
      %s484 = ssub.s32 256, 256
      %485 = vsyncadd [#allocation4], %s484
      %s486 = sshll.u32 [#allocation10], 4
      %s487 = int_to_ptr.vmem [resolvable:$true] %s486
      %492 = dma.vmem_to_hbm [thread:$0]  %s487, 256, %s7, [#allocation4], 128, 128, 8
    $region49: #{tpu_custom_call.1} parent=1 // pred_fallthru
      _
    // Predicated region
    $region50: #{tpu_custom_call.1} parent=1 // pred_check
      _
    $region51: #{tpu_custom_call.1} parent=1 // pred_check_branch
      %494 = sbr.rel (0) target = $region53
    $region52: #{tpu_custom_call.1} parent=1 // pred_region
      %495 = dma.done [#allocation4], 256
    $region53: #{tpu_custom_call.1} parent=1 // pred_fallthru
      _
    %496 = vsyncpa [#allocation3], 1
    %497 = vsyncpa [#allocation6], 1
    %498 = vsyncpa [#allocation9], 1
    %499 = vsyncpa [#allocation4], 1

// kernel: tpu_custom_call.1
$region0: #{tpu_custom_call.1}
  #allocation0 [shape = 'u32[]', space=smem, size = 0x4, offset = 0x4, fixed_abs, tag = 'smem constant byte address 0x4 - core index']
  #allocation1 [shape = 'u32[144,128]{1,0:T(1,128)}', space=vmem, size = 0x12000, scoped, tag = 'internal scratch']
  %s0 = inlined_call_operand.hbm [shape: f32[16,32], index: 0, kind: input, shape index: {}]
  %s1 = inlined_call_operand.hbm [shape: f32[32,128], index: 1, kind: input, shape index: {}]
  %s2 = inlined_call_operand.vmem [shape: f32[1,128], index: 2, kind: input, shape index: {}]
  %s3 = inlined_call_operand.hbm [shape: f32[2,128,128], index: 3, kind: input, shape index: {}]
  %s4 = inlined_call_operand.vmem [shape: f32[2,1,128], index: 4, kind: input, shape index: {}]
  %s5 = inlined_call_operand.hbm [shape: f32[128,128], index: 5, kind: input, shape index: {}]
  %s6 = inlined_call_operand.vmem [shape: f32[1,128], index: 6, kind: input, shape index: {}]
  %s7 = inlined_call_operand.hbm [shape: f32[16,128], index: 7, kind: output, shape index: {}]
  %s8 = sld [smem:[#allocation0]]
  $region54: #{tpu_custom_call.1} parent=0
    _
  %s10 = ssub.s32 1, %s8
  %s11 = scalar_select 0, %s10, %s8
  $region1: #{tpu_custom_call.1} parent=0
    #allocation2 [shape = 'u8[8192]{0}', space=vmem, size = 0x2000, scoped, tag = 'input window, operand 0, single buffered']
    #allocation3 [shape = 's32[1]{0}', space=sflag, size = 0x4, scoped, tag = 'scoped memory for tpu_custom_call.1']
    #allocation4 [shape = 's32[1]{0}', space=sflag, size = 0x4, scoped, tag = 'scoped memory for tpu_custom_call.1']
    #allocation5 [shape = 'u8[16384]{0}', space=vmem, size = 0x4000, scoped, tag = 'input window, operand 1, single buffered']
    #allocation6 [shape = 's32[1]{0}', space=sflag, size = 0x4, scoped, tag = 'scoped memory for tpu_custom_call.1']
    #allocation7 [shape = 'u8[131072]{0}', space=vmem, size = 0x20000, scoped, tag = 'input window, operand 3, single buffered']
    #allocation8 [shape = 'u8[65536]{0}', space=vmem, size = 0x10000, scoped, tag = 'input window, operand 5, single buffered']
    #allocation9 [shape = 's32[1]{0}', space=sflag, size = 0x4, scoped, tag = 'scoped memory for tpu_custom_call.1']
    #allocation10 [shape = 'u8[8192]{0}', space=vmem, size = 0x2000, scoped, tag = 'output window, operand 0, single buffered']
    %12 = vsyncpa [#allocation3], 0
    %13 = vsyncpa [#allocation6], 0
    %14 = vsyncpa [#allocation9], 0
    %15 = vsyncpa [#allocation4], 0
    // Predicated region
    $region2: #{tpu_custom_call.1} parent=1 // pred_check
      _
    $region3: #{tpu_custom_call.1} parent=1 // pred_check_branch
      %17 = sbr.rel (0) target = $region5
    $region4: #{tpu_custom_call.1} parent=1 // pred_region
      %s19 = ssub.s32 256, 256
      %20 = vsyncadd [#allocation3], %s19
      %s21 = sshll.u32 [#allocation2], 4
      %s22 = int_to_ptr.vmem [resolvable:$true] %s21
      %27 = dma.hbm_to_vmem [thread:$0]  %s0, 256, %s22, [#allocation3], 128, 128, 8
    $region5: #{tpu_custom_call.1} parent=1 // pred_fallthru
      _
    // Predicated region
    $region6: #{tpu_custom_call.1} parent=1 // pred_check
      _
    $region7: #{tpu_custom_call.1} parent=1 // pred_check_branch
      %29 = sbr.rel (0) target = $region9
    $region8: #{tpu_custom_call.1} parent=1 // pred_region
      %s31 = ssub.s32 512, 512
      %32 = vsyncadd [#allocation6], %s31
      %s33 = sshll.u32 [#allocation5], 4
      %s34 = int_to_ptr.vmem [resolvable:$true] %s33
      %39 = dma.hbm_to_vmem [thread:$0]  %s1, 512, %s34, [#allocation6], 128, 128, 8
    $region9: #{tpu_custom_call.1} parent=1 // pred_fallthru
      _
    // Predicated region
    $region10: #{tpu_custom_call.1} parent=1 // pred_check
      _
    $region11: #{tpu_custom_call.1} parent=1 // pred_check_branch
      %41 = sbr.rel (0) target = $region13
    $region12: #{tpu_custom_call.1} parent=1 // pred_region
      _
    $region13: #{tpu_custom_call.1} parent=1 // pred_fallthru
      _
    // Predicated region
    $region14: #{tpu_custom_call.1} parent=1 // pred_check
      _
    $region15: #{tpu_custom_call.1} parent=1 // pred_check_branch
      %43 = sbr.rel (0) target = $region17
    $region16: #{tpu_custom_call.1} parent=1 // pred_region
      %s45 = ssub.s32 4096, 4096
      %46 = vsyncadd [#allocation6], %s45
      %s47 = sshll.u32 [#allocation7], 4
      %s48 = int_to_ptr.vmem [resolvable:$true] %s47
      %53 = dma.hbm_to_vmem [thread:$0]  %s3, 4096, %s48, [#allocation6], 128, 128, 8
    $region17: #{tpu_custom_call.1} parent=1 // pred_fallthru
      _
    // Predicated region
    $region18: #{tpu_custom_call.1} parent=1 // pred_check
      _
    $region19: #{tpu_custom_call.1} parent=1 // pred_check_branch
      %55 = sbr.rel (0) target = $region21
    $region20: #{tpu_custom_call.1} parent=1 // pred_region
      _
    $region21: #{tpu_custom_call.1} parent=1 // pred_fallthru
      _
    // Predicated region
    $region22: #{tpu_custom_call.1} parent=1 // pred_check
      _
    $region23: #{tpu_custom_call.1} parent=1 // pred_check_branch
      %57 = sbr.rel (0) target = $region25
    $region24: #{tpu_custom_call.1} parent=1 // pred_region
      %s59 = ssub.s32 2048, 2048
      %60 = vsyncadd [#allocation9], %s59
      %s61 = sshll.u32 [#allocation8], 4
      %s62 = int_to_ptr.vmem [resolvable:$true] %s61
      %67 = dma.hbm_to_vmem [thread:$0]  %s5, 2048, %s62, [#allocation9], 128, 128, 8
    $region25: #{tpu_custom_call.1} parent=1 // pred_fallthru
      _
    // Predicated region
    $region26: #{tpu_custom_call.1} parent=1 // pred_check
      _
    $region27: #{tpu_custom_call.1} parent=1 // pred_check_branch
      %69 = sbr.rel (0) target = $region29
    $region28: #{tpu_custom_call.1} parent=1 // pred_region
      _
    $region29: #{tpu_custom_call.1} parent=1 // pred_fallthru
      _
    // Predicated region
    $region30: #{tpu_custom_call.1} parent=1 // pred_check
      _
    $region31: #{tpu_custom_call.1} parent=1 // pred_check_branch
      %71 = sbr.rel (0) target = $region33
    $region32: #{tpu_custom_call.1} parent=1 // pred_region
      %72 = dma.done [#allocation3], 256
    $region33: #{tpu_custom_call.1} parent=1 // pred_fallthru
      _
    // Predicated region
    $region34: #{tpu_custom_call.1} parent=1 // pred_check
      _
    $region35: #{tpu_custom_call.1} parent=1 // pred_check_branch
      %74 = sbr.rel (0) target = $region37
    $region36: #{tpu_custom_call.1} parent=1 // pred_region
      %75 = dma.done [#allocation6], 512
    $region37: #{tpu_custom_call.1} parent=1 // pred_fallthru
      _
    // Predicated region
    $region38: #{tpu_custom_call.1} parent=1 // pred_check
      _
    $region39: #{tpu_custom_call.1} parent=1 // pred_check_branch
      %77 = sbr.rel (0) target = $region41
    $region40: #{tpu_custom_call.1} parent=1 // pred_region
      %78 = dma.done [#allocation6], 4096
    $region41: #{tpu_custom_call.1} parent=1 // pred_fallthru
      _
    // Predicated region
    $region42: #{tpu_custom_call.1} parent=1 // pred_check
      _
    $region43: #{tpu_custom_call.1} parent=1 // pred_check_branch
      %80 = sbr.rel (0) target = $region45
    $region44: #{tpu_custom_call.1} parent=1 // pred_region
      %81 = dma.done [#allocation9], 2048
    $region45: #{tpu_custom_call.1} parent=1 // pred_fallthru
      _
    %v82 = vld [vmem:[#allocation2] sm:$0xff]
    %v83 = vld [vmem:[#allocation2 + $0x8] sm:$0xff]
    %v84 = vld [vmem:[#allocation5] sm:$0xff]
    %v85 = vld [vmem:[#allocation5 + $0x8] sm:$0xff]
    %v86 = vld [vmem:[#allocation5 + $0x10] sm:$0xff]
    %v87 = vld [vmem:[#allocation5 + $0x18] sm:$0xff]
    %v88 = vld [vmem:[%s2] sm:$0x1]
    %v90 = vlaneseq
    %v91 = vshrl.u32 %v90, 7
    %v92 = vsub.s32 0, %v91
    %v93 = vrot.slane %v88, %v92
    %vm95 = vcmask 261120
    %v97 = vsel %vm95, %v82, 0
    %v100 = vsel %vm95, %v83, 0
    %102 = vmatprep.subr.mxu0 0.0
    %103 = vmatpush1.msra.mxu0 0.0
    %104 = vmatprep.subr.mxu0 0.0
    %105 = vmatpush1.msra.mxu0 0.0
    %106 = vmatprep.subr.mxu0 0.0
    %107 = vmatpush1.msra.mxu0 0.0
    %108 = vmatprep.subr.mxu0 0.0
    %109 = vmatpush1.msra.mxu0 0.0
    %110 = vmatprep.subr.mxu0 0.0
    %111 = vmatpush1.msra.mxu0 0.0
    %112 = vmatprep.subr.mxu0 0.0
    %113 = vmatpush1.msra.mxu0 0.0
    %114 = vmatprep.subr.mxu0 0.0
    %115 = vmatpush1.msra.mxu0 0.0
    %116 = vmatprep.subr.mxu0 0.0
    %117 = vmatpush1.msra.mxu0 0.0
    %118 = vmatprep.subr.mxu0 0.0
    %119 = vmatpush1.msra.mxu0 0.0
    %120 = vmatprep.subr.mxu0 0.0
    %121 = vmatpush1.msra.mxu0 0.0
    %122 = vmatprep.subr.mxu0 0.0
    %123 = vmatpush1.msra.mxu0 0.0
    %124 = vmatprep.subr.mxu0 0.0
    %125 = vmatpush1.msra.mxu0 0.0
    %126 = vmatprep.subr.mxu0 0.0
    %127 = vmatpush1.msra.mxu0 %v87
    %128 = vmatprep.subr.mxu0 0.0
    %129 = vmatpush1.msra.mxu0 %v86
    %130 = vmatprep.subr.mxu0 0.0
    %131 = vmatpush1.msra.mxu0 %v85
    %132 = vmatprep.subr.mxu0 0.0
    %133 = vmatpush1.msra.mxu0 %v84
    %134 = vmatprep.subr.mxu0 0.0
    %135 = vmatpush2.msra.mxu0 0.0
    %136 = vmatprep.subr.mxu0 0.0
    %137 = vmatpush2.msra.mxu0 0.0
    %138 = vmatprep.subr.mxu0 0.0
    %139 = vmatpush2.msra.mxu0 0.0
    %140 = vmatprep.subr.mxu0 0.0
    %141 = vmatpush2.msra.mxu0 0.0
    %142 = vmatprep.subr.mxu0 0.0
    %143 = vmatpush2.msra.mxu0 0.0
    %144 = vmatprep.subr.mxu0 0.0
    %145 = vmatpush2.msra.mxu0 0.0
    %146 = vmatprep.subr.mxu0 0.0
    %147 = vmatpush2.msra.mxu0 0.0
    %148 = vmatprep.subr.mxu0 0.0
    %149 = vmatpush2.msra.mxu0 0.0
    %150 = vmatprep.subr.mxu0 0.0
    %151 = vmatpush2.msra.mxu0 0.0
    %152 = vmatprep.subr.mxu0 0.0
    %153 = vmatpush2.msra.mxu0 0.0
    %154 = vmatprep.subr.mxu0 0.0
    %155 = vmatpush2.msra.mxu0 0.0
    %156 = vmatprep.subr.mxu0 0.0
    %157 = vmatpush2.msra.mxu0 0.0
    %158 = vmatprep.subr.mxu0 0.0
    %159 = vmatpush2.msra.mxu0 0.0
    %160 = vmatprep.subr.mxu0 0.0
    %161 = vmatpush2.msra.mxu0 0.0
    %162 = vmatprep.subr.mxu0 0.0
    %163 = vmatpush2.msra.mxu0 0.0
    %164 = vmatprep.subr.mxu0 0.0
    %165 = vmatpush2.msra.mxu0 0.0
    %166 = vmatprep.mubr.f32.mxu0 0.0
    %167 = vmatmul.mubr.f32.gmra.mxu0 %v97
    %v168 = vpop.f32.mrf.mxu0
    %v169 = vadd.f32 %v93, %v168
    %v170 = vpop.f32.mrf.mxu0
    %171 = vmatprep.mubr.f32.mxu0 0.0
    %172 = vmatmul.mubr.f32.gmra.mxu0 %v100
    %v173 = vpop.f32.mrf.mxu0
    %v174 = vadd.f32 %v93, %v173
    %v175 = vpop.f32.mrf.mxu0
    %176 = vdwg.mxu0
    %v177 = vmax.f32 %v169, 0.0
    %v178 = vmax.f32 %v174, 0.0
    %v179 = vld [vmem:[#allocation7] sm:$0xff]
    %v180 = vld [vmem:[#allocation7 + $0x8] sm:$0xff]
    %v181 = vld [vmem:[#allocation7 + $0x10] sm:$0xff]
    %v182 = vld [vmem:[#allocation7 + $0x18] sm:$0xff]
    %v183 = vld [vmem:[#allocation7 + $0x20] sm:$0xff]
    %v184 = vld [vmem:[#allocation7 + $0x28] sm:$0xff]
    %v185 = vld [vmem:[#allocation7 + $0x30] sm:$0xff]
    %v186 = vld [vmem:[#allocation7 + $0x38] sm:$0xff]
    %v187 = vld [vmem:[#allocation7 + $0x40] sm:$0xff]
    %v188 = vld [vmem:[#allocation7 + $0x48] sm:$0xff]
    %v189 = vld [vmem:[#allocation7 + $0x50] sm:$0xff]
    %v190 = vld [vmem:[#allocation7 + $0x58] sm:$0xff]
    %v191 = vld [vmem:[#allocation7 + $0x60] sm:$0xff]
    %v192 = vld [vmem:[#allocation7 + $0x68] sm:$0xff]
    %v193 = vld [vmem:[#allocation7 + $0x70] sm:$0xff]
    %v194 = vld [vmem:[#allocation7 + $0x78] sm:$0xff]
    %v195 = vld [vmem:[%s4] sm:$0x1]
    %v197 = vlaneseq
    %v198 = vshrl.u32 %v197, 7
    %v199 = vsub.s32 0, %v198
    %v200 = vrot.slane %v195, %v199
    %202 = vmatprep.subr.mxu0 0.0
    %203 = vmatpush1.msra.mxu0 %v194
    %204 = vmatprep.subr.mxu0 0.0
    %205 = vmatpush1.msra.mxu0 %v193
    %206 = vmatprep.subr.mxu0 0.0
    %207 = vmatpush1.msra.mxu0 %v192
    %208 = vmatprep.subr.mxu0 0.0
    %209 = vmatpush1.msra.mxu0 %v191
    %210 = vmatprep.subr.mxu0 0.0
    %211 = vmatpush1.msra.mxu0 %v190
    %212 = vmatprep.subr.mxu0 0.0
    %213 = vmatpush1.msra.mxu0 %v189
    %214 = vmatprep.subr.mxu0 0.0
    %215 = vmatpush1.msra.mxu0 %v188
    %216 = vmatprep.subr.mxu0 0.0
    %217 = vmatpush1.msra.mxu0 %v187
    %218 = vmatprep.subr.mxu0 0.0
    %219 = vmatpush1.msra.mxu0 %v186
    %220 = vmatprep.subr.mxu0 0.0
    %221 = vmatpush1.msra.mxu0 %v185
    %222 = vmatprep.subr.mxu0 0.0
    %223 = vmatpush1.msra.mxu0 %v184
    %224 = vmatprep.subr.mxu0 0.0
    %225 = vmatpush1.msra.mxu0 %v183
    %226 = vmatprep.subr.mxu0 0.0
    %227 = vmatpush1.msra.mxu0 %v182
    %228 = vmatprep.subr.mxu0 0.0
    %229 = vmatpush1.msra.mxu0 %v181
    %230 = vmatprep.subr.mxu0 0.0
    %231 = vmatpush1.msra.mxu0 %v180
    %232 = vmatprep.subr.mxu0 0.0
    %233 = vmatpush1.msra.mxu0 %v179
    %234 = vmatprep.subr.mxu0 0.0
    %235 = vmatpush2.msra.mxu0 0.0
    %236 = vmatprep.subr.mxu0 0.0
    %237 = vmatpush2.msra.mxu0 0.0
    %238 = vmatprep.subr.mxu0 0.0
    %239 = vmatpush2.msra.mxu0 0.0
    %240 = vmatprep.subr.mxu0 0.0
    %241 = vmatpush2.msra.mxu0 0.0
    %242 = vmatprep.subr.mxu0 0.0
    %243 = vmatpush2.msra.mxu0 0.0
    %244 = vmatprep.subr.mxu0 0.0
    %245 = vmatpush2.msra.mxu0 0.0
    %246 = vmatprep.subr.mxu0 0.0
    %247 = vmatpush2.msra.mxu0 0.0
    %248 = vmatprep.subr.mxu0 0.0
    %249 = vmatpush2.msra.mxu0 0.0
    %250 = vmatprep.subr.mxu0 0.0
    %251 = vmatpush2.msra.mxu0 0.0
    %252 = vmatprep.subr.mxu0 0.0
    %253 = vmatpush2.msra.mxu0 0.0
    %254 = vmatprep.subr.mxu0 0.0
    %255 = vmatpush2.msra.mxu0 0.0
    %256 = vmatprep.subr.mxu0 0.0
    %257 = vmatpush2.msra.mxu0 0.0
    %258 = vmatprep.subr.mxu0 0.0
    %259 = vmatpush2.msra.mxu0 0.0
    %260 = vmatprep.subr.mxu0 0.0
    %261 = vmatpush2.msra.mxu0 0.0
    %262 = vmatprep.subr.mxu0 0.0
    %263 = vmatpush2.msra.mxu0 0.0
    %264 = vmatprep.subr.mxu0 0.0
    %265 = vmatpush2.msra.mxu0 0.0
    %266 = vmatprep.mubr.f32.mxu0 0.0
    %267 = vmatmul.mubr.f32.gmra.mxu0 %v177
    %v268 = vpop.f32.mrf.mxu0
    %v269 = vadd.f32 %v200, %v268
    %v270 = vpop.f32.mrf.mxu0
    %271 = vmatprep.mubr.f32.mxu0 0.0
    %272 = vmatmul.mubr.f32.gmra.mxu0 %v178
    %v273 = vpop.f32.mrf.mxu0
    %v274 = vadd.f32 %v200, %v273
    %v275 = vpop.f32.mrf.mxu0
    %276 = vdwg.mxu0
    %v277 = vmax.f32 %v269, 0.0
    %v278 = vmax.f32 %v274, 0.0
    %s279 = scalar_lea.vmem [#allocation7], 128
    %v280 = vld [vmem:[%s279] sm:$0xff]
    %v281 = vld [vmem:[%s279 + $0x8] sm:$0xff]
    %v282 = vld [vmem:[%s279 + $0x10] sm:$0xff]
    %v283 = vld [vmem:[%s279 + $0x18] sm:$0xff]
    %v284 = vld [vmem:[%s279 + $0x20] sm:$0xff]
    %v285 = vld [vmem:[%s279 + $0x28] sm:$0xff]
    %v286 = vld [vmem:[%s279 + $0x30] sm:$0xff]
    %v287 = vld [vmem:[%s279 + $0x38] sm:$0xff]
    %v288 = vld [vmem:[%s279 + $0x40] sm:$0xff]
    %v289 = vld [vmem:[%s279 + $0x48] sm:$0xff]
    %v290 = vld [vmem:[%s279 + $0x50] sm:$0xff]
    %v291 = vld [vmem:[%s279 + $0x58] sm:$0xff]
    %v292 = vld [vmem:[%s279 + $0x60] sm:$0xff]
    %v293 = vld [vmem:[%s279 + $0x68] sm:$0xff]
    %v294 = vld [vmem:[%s279 + $0x70] sm:$0xff]
    %v295 = vld [vmem:[%s279 + $0x78] sm:$0xff]
    %s296 = scalar_lea.vmem %s4, 1
    %v297 = vld [vmem:[%s296] sm:$0x1]
    %v299 = vlaneseq
    %v300 = vshrl.u32 %v299, 7
    %v301 = vsub.s32 0, %v300
    %v302 = vrot.slane %v297, %v301
    %304 = vmatprep.subr.mxu0 0.0
    %305 = vmatpush1.msra.mxu0 %v295
    %306 = vmatprep.subr.mxu0 0.0
    %307 = vmatpush1.msra.mxu0 %v294
    %308 = vmatprep.subr.mxu0 0.0
    %309 = vmatpush1.msra.mxu0 %v293
    %310 = vmatprep.subr.mxu0 0.0
    %311 = vmatpush1.msra.mxu0 %v292
    %312 = vmatprep.subr.mxu0 0.0
    %313 = vmatpush1.msra.mxu0 %v291
    %314 = vmatprep.subr.mxu0 0.0
    %315 = vmatpush1.msra.mxu0 %v290
    %316 = vmatprep.subr.mxu0 0.0
    %317 = vmatpush1.msra.mxu0 %v289
    %318 = vmatprep.subr.mxu0 0.0
    %319 = vmatpush1.msra.mxu0 %v288
    %320 = vmatprep.subr.mxu0 0.0
    %321 = vmatpush1.msra.mxu0 %v287
    %322 = vmatprep.subr.mxu0 0.0
    %323 = vmatpush1.msra.mxu0 %v286
    %324 = vmatprep.subr.mxu0 0.0
    %325 = vmatpush1.msra.mxu0 %v285
    %326 = vmatprep.subr.mxu0 0.0
    %327 = vmatpush1.msra.mxu0 %v284
    %328 = vmatprep.subr.mxu0 0.0
    %329 = vmatpush1.msra.mxu0 %v283
    %330 = vmatprep.subr.mxu0 0.0
    %331 = vmatpush1.msra.mxu0 %v282
    %332 = vmatprep.subr.mxu0 0.0
    %333 = vmatpush1.msra.mxu0 %v281
    %334 = vmatprep.subr.mxu0 0.0
    %335 = vmatpush1.msra.mxu0 %v280
    %336 = vmatprep.subr.mxu0 0.0
    %337 = vmatpush2.msra.mxu0 0.0
    %338 = vmatprep.subr.mxu0 0.0
    %339 = vmatpush2.msra.mxu0 0.0
    %340 = vmatprep.subr.mxu0 0.0
    %341 = vmatpush2.msra.mxu0 0.0
    %342 = vmatprep.subr.mxu0 0.0
    %343 = vmatpush2.msra.mxu0 0.0
    %344 = vmatprep.subr.mxu0 0.0
    %345 = vmatpush2.msra.mxu0 0.0
    %346 = vmatprep.subr.mxu0 0.0
    %347 = vmatpush2.msra.mxu0 0.0
    %348 = vmatprep.subr.mxu0 0.0
    %349 = vmatpush2.msra.mxu0 0.0
    %350 = vmatprep.subr.mxu0 0.0
    %351 = vmatpush2.msra.mxu0 0.0
    %352 = vmatprep.subr.mxu0 0.0
    %353 = vmatpush2.msra.mxu0 0.0
    %354 = vmatprep.subr.mxu0 0.0
    %355 = vmatpush2.msra.mxu0 0.0
    %356 = vmatprep.subr.mxu0 0.0
    %357 = vmatpush2.msra.mxu0 0.0
    %358 = vmatprep.subr.mxu0 0.0
    %359 = vmatpush2.msra.mxu0 0.0
    %360 = vmatprep.subr.mxu0 0.0
    %361 = vmatpush2.msra.mxu0 0.0
    %362 = vmatprep.subr.mxu0 0.0
    %363 = vmatpush2.msra.mxu0 0.0
    %364 = vmatprep.subr.mxu0 0.0
    %365 = vmatpush2.msra.mxu0 0.0
    %366 = vmatprep.subr.mxu0 0.0
    %367 = vmatpush2.msra.mxu0 0.0
    %368 = vmatprep.mubr.f32.mxu0 0.0
    %369 = vmatmul.mubr.f32.gmra.mxu0 %v277
    %v370 = vpop.f32.mrf.mxu0
    %v371 = vadd.f32 %v302, %v370
    %v372 = vpop.f32.mrf.mxu0
    %373 = vmatprep.mubr.f32.mxu0 0.0
    %374 = vmatmul.mubr.f32.gmra.mxu0 %v278
    %v375 = vpop.f32.mrf.mxu0
    %v376 = vadd.f32 %v302, %v375
    %v377 = vpop.f32.mrf.mxu0
    %378 = vdwg.mxu0
    %v379 = vmax.f32 %v371, 0.0
    %v380 = vmax.f32 %v376, 0.0
    %v381 = vld [vmem:[#allocation8] sm:$0xff]
    %v382 = vld [vmem:[#allocation8 + $0x8] sm:$0xff]
    %v383 = vld [vmem:[#allocation8 + $0x10] sm:$0xff]
    %v384 = vld [vmem:[#allocation8 + $0x18] sm:$0xff]
    %v385 = vld [vmem:[#allocation8 + $0x20] sm:$0xff]
    %v386 = vld [vmem:[#allocation8 + $0x28] sm:$0xff]
    %v387 = vld [vmem:[#allocation8 + $0x30] sm:$0xff]
    %v388 = vld [vmem:[#allocation8 + $0x38] sm:$0xff]
    %v389 = vld [vmem:[#allocation8 + $0x40] sm:$0xff]
    %v390 = vld [vmem:[#allocation8 + $0x48] sm:$0xff]
    %v391 = vld [vmem:[#allocation8 + $0x50] sm:$0xff]
    %v392 = vld [vmem:[#allocation8 + $0x58] sm:$0xff]
    %v393 = vld [vmem:[#allocation8 + $0x60] sm:$0xff]
    %v394 = vld [vmem:[#allocation8 + $0x68] sm:$0xff]
    %v395 = vld [vmem:[#allocation8 + $0x70] sm:$0xff]
    %v396 = vld [vmem:[#allocation8 + $0x78] sm:$0xff]
    %v397 = vld [vmem:[%s6] sm:$0x1]
    %v399 = vlaneseq
    %v400 = vshrl.u32 %v399, 7
    %v401 = vsub.s32 0, %v400
    %v402 = vrot.slane %v397, %v401
    %404 = vmatprep.subr.mxu0 0.0
    %405 = vmatpush1.msra.mxu0 %v396
    %406 = vmatprep.subr.mxu0 0.0
    %407 = vmatpush1.msra.mxu0 %v395
    %408 = vmatprep.subr.mxu0 0.0
    %409 = vmatpush1.msra.mxu0 %v394
    %410 = vmatprep.subr.mxu0 0.0
    %411 = vmatpush1.msra.mxu0 %v393
    %412 = vmatprep.subr.mxu0 0.0
    %413 = vmatpush1.msra.mxu0 %v392
    %414 = vmatprep.subr.mxu0 0.0
    %415 = vmatpush1.msra.mxu0 %v391
    %416 = vmatprep.subr.mxu0 0.0
    %417 = vmatpush1.msra.mxu0 %v390
    %418 = vmatprep.subr.mxu0 0.0
    %419 = vmatpush1.msra.mxu0 %v389
    %420 = vmatprep.subr.mxu0 0.0
    %421 = vmatpush1.msra.mxu0 %v388
    %422 = vmatprep.subr.mxu0 0.0
    %423 = vmatpush1.msra.mxu0 %v387
    %424 = vmatprep.subr.mxu0 0.0
    %425 = vmatpush1.msra.mxu0 %v386
    %426 = vmatprep.subr.mxu0 0.0
    %427 = vmatpush1.msra.mxu0 %v385
    %428 = vmatprep.subr.mxu0 0.0
    %429 = vmatpush1.msra.mxu0 %v384
    %430 = vmatprep.subr.mxu0 0.0
    %431 = vmatpush1.msra.mxu0 %v383
    %432 = vmatprep.subr.mxu0 0.0
    %433 = vmatpush1.msra.mxu0 %v382
    %434 = vmatprep.subr.mxu0 0.0
    %435 = vmatpush1.msra.mxu0 %v381
    %436 = vmatprep.subr.mxu0 0.0
    %437 = vmatpush2.msra.mxu0 0.0
    %438 = vmatprep.subr.mxu0 0.0
    %439 = vmatpush2.msra.mxu0 0.0
    %440 = vmatprep.subr.mxu0 0.0
    %441 = vmatpush2.msra.mxu0 0.0
    %442 = vmatprep.subr.mxu0 0.0
    %443 = vmatpush2.msra.mxu0 0.0
    %444 = vmatprep.subr.mxu0 0.0
    %445 = vmatpush2.msra.mxu0 0.0
    %446 = vmatprep.subr.mxu0 0.0
    %447 = vmatpush2.msra.mxu0 0.0
    %448 = vmatprep.subr.mxu0 0.0
    %449 = vmatpush2.msra.mxu0 0.0
    %450 = vmatprep.subr.mxu0 0.0
    %451 = vmatpush2.msra.mxu0 0.0
    %452 = vmatprep.subr.mxu0 0.0
    %453 = vmatpush2.msra.mxu0 0.0
    %454 = vmatprep.subr.mxu0 0.0
    %455 = vmatpush2.msra.mxu0 0.0
    %456 = vmatprep.subr.mxu0 0.0
    %457 = vmatpush2.msra.mxu0 0.0
    %458 = vmatprep.subr.mxu0 0.0
    %459 = vmatpush2.msra.mxu0 0.0
    %460 = vmatprep.subr.mxu0 0.0
    %461 = vmatpush2.msra.mxu0 0.0
    %462 = vmatprep.subr.mxu0 0.0
    %463 = vmatpush2.msra.mxu0 0.0
    %464 = vmatprep.subr.mxu0 0.0
    %465 = vmatpush2.msra.mxu0 0.0
    %466 = vmatprep.subr.mxu0 0.0
    %467 = vmatpush2.msra.mxu0 0.0
    %468 = vmatprep.mubr.f32.mxu0 0.0
    %469 = vmatmul.mubr.f32.gmra.mxu0 %v379
    %v470 = vpop.f32.mrf.mxu0
    %v471 = vadd.f32 %v402, %v470
    %v472 = vpop.f32.mrf.mxu0
    %473 = vmatprep.mubr.f32.mxu0 0.0
    %474 = vmatmul.mubr.f32.gmra.mxu0 %v380
    %v475 = vpop.f32.mrf.mxu0
    %v476 = vadd.f32 %v402, %v475
    %v477 = vpop.f32.mrf.mxu0
    %478 = vdwg.mxu0
    %479 = vst [vmem:[#allocation10] sm:$0xff] %v471
    %480 = vst [vmem:[#allocation10 + $0x8] sm:$0xff] %v476
    // Predicated region
    $region46: #{tpu_custom_call.1} parent=1 // pred_check
      _
    $region47: #{tpu_custom_call.1} parent=1 // pred_check_branch
      %482 = sbr.rel (0) target = $region49
    $region48: #{tpu_custom_call.1} parent=1 // pred_region
      %s484 = ssub.s32 256, 256
      %485 = vsyncadd [#allocation4], %s484
      %s486 = sshll.u32 [#allocation10], 4
      %s487 = int_to_ptr.vmem [resolvable:$true] %s486
      %492 = dma.vmem_to_hbm [thread:$0]  %s487, 256, %s7, [#allocation4], 128, 128, 8
    $region49: #{tpu_custom_call.1} parent=1 // pred_fallthru
      _
    // Predicated region
    $region50: #{tpu_custom_call.1} parent=1 // pred_check
      _
    $region51: #{tpu_custom_call.1} parent=1 // pred_check_branch
      %494 = sbr.rel (0) target = $region53
    $region52: #{tpu_custom_call.1} parent=1 // pred_region
      %495 = dma.done [#allocation4], 256
    $region53: #{tpu_custom_call.1} parent=1 // pred_fallthru
      _
    %496 = vsyncpa [#allocation3], 1
    %497 = vsyncpa [#allocation6], 1
    %498 = vsyncpa [#allocation9], 1
    %499 = vsyncpa [#allocation4], 1

</llo_original>
